<compile_context>
chip_gen: v6e
topology: v6e:2x2x1
jax: 0.10.0
libtpu: 0.0.40
codegen_flags: <defaults>
</compile_context>

<pallas_src>
import math
import functools

import jax
import jax.numpy as jnp
from jax import lax
from jax.experimental import pallas as pl
from jax.experimental.pallas import tpu as pltpu


def _leaky(v):                      # LeakyReLU(0.2)
    return jnp.where(v > 0, v, 0.2 * v)


# ---------------------------------------------------------------------------
# Fused kernel: conv stack -> temporal attention -> mean pool -> classifier
# ---------------------------------------------------------------------------

def _disc_kernel(x_ref,
                 w1_ref, b1_ref, w2_ref, b2_ref, w3_ref, b3_ref,
                 wqkv_ref, bqkv_ref,
                 wc1_ref, bc1_ref, wc2_ref, bc2_ref, wc3_ref, bc3_ref,
                 out_ref):
    Bt, S, Cin = x_ref.shape
    rows = Bt * S

    # Per-row sequence position (shared across all conv layers).
    row = lax.broadcasted_iota(jnp.int32, (rows, 1), 0)
    t = row % S
    not_first = t != 0           # zero the wrapped row of the x[t-1] tap
    not_last = t != (S - 1)      # zero the wrapped row of the x[t+1] tap

    def conv1d_k3(h2, w_ref, b_ref):
        """Conv1d(kernel_size=3, padding=1) as ONE matmul on (Bt*S, 3*Cin).

        h2:    (Bt*S, C)   channels-last rows (f32)
        w_ref: (3*C, Cout) taps stacked along K: [x[t-1] | x[t] | x[t+1]]
        b_ref: (1, Cout)   bias (BatchNorm already folded where applicable)
        """
        hm1 = jnp.where(not_first, pltpu.roll(h2, shift=1, axis=0), 0.0)
        hp1 = jnp.where(not_last, pltpu.roll(h2, shift=rows - 1, axis=0), 0.0)
        fused = jnp.concatenate([hm1, h2, hp1], axis=1).astype(jnp.bfloat16)
        y = jnp.dot(fused, w_ref[...], preferred_element_type=jnp.float32)
        return _leaky(y + b_ref[...])

    # ---- conv_layers (Dropout = identity, BatchNorm folded into w2/w3) ----
    h = x_ref[...].reshape(rows, Cin).astype(jnp.float32)
    h = conv1d_k3(h, w1_ref, b1_ref)            # (rows, 32)
    h = conv1d_k3(h, w2_ref, b2_ref)            # (rows, 64)
    h = conv1d_k3(h, w3_ref, b3_ref)            # (rows, 128)

    # ---- TemporalAttention (attention dropout = identity in eval) ----
    D = h.shape[-1]                              # 128
    P = wqkv_ref.shape[1] // 3                   # padded head width (128)
    qkv = (jnp.dot(h.astype(jnp.bfloat16), wqkv_ref[...],
                   preferred_element_type=jnp.float32) + bqkv_ref[...])
    # 1/sqrt(attention_dim) is folded into W_q/b_q; padded lanes of q/k are zero.
    q = qkv[:, :P].reshape(Bt, S, P).astype(jnp.bfloat16)
    k = qkv[:, P:2 * P].reshape(Bt, S, P).astype(jnp.bfloat16)
    v = qkv[:, 2 * P:].reshape(Bt, S, D)

    scores = jnp.einsum('bsa,bta->bst', q, k,
                        preferred_element_type=jnp.float32)          # (Bt, S, S)
    scores = scores - jnp.max(scores, axis=-1, keepdims=True)
    e = jnp.exp(scores)
    inv = pl.reciprocal(jnp.sum(e, axis=-1, keepdims=True), approx=True)
    # pooled = mean_s(softmax(scores)) @ V  (linearity of the mean over queries)
    wmean = jnp.sum(e * inv, axis=1) * (1.0 / S)                      # (Bt, S)
    pooled = jnp.sum(wmean[:, :, None] * v, axis=1)                   # (Bt, D)

    # ---- classifier (spectral_norm + BatchNorm folded; Dropout identity) ----
    c = _leaky(jnp.dot(pooled.astype(jnp.bfloat16), wc1_ref[...],
                       preferred_element_type=jnp.float32) + bc1_ref[...])
    c = _leaky(jnp.dot(c.astype(jnp.bfloat16), wc2_ref[...],
                       preferred_element_type=jnp.float32) + bc2_ref[...])
    logit = jnp.dot(c.astype(jnp.bfloat16), wc3_ref[...],
                    preferred_element_type=jnp.float32) + bc3_ref[...]
    out_ref[...] = jax.nn.sigmoid(logit)                              # (Bt, 1)


# ---------------------------------------------------------------------------
# Wrapper: batch grid + VMEM-resident weights
# ---------------------------------------------------------------------------

@functools.partial(jax.jit, static_argnames=("block_b",))
def discriminator_forward(params, x, *, block_b=None):
    """x: (B, S, input_dim) -> (B, 1)."""
    B, S, Cin = x.shape
    if block_b is None:
        block_b = 8 if B % 8 == 0 else B      # keep the second-minor block dim 8-aligned
    assert B % block_b == 0
    nb = B // block_b

    weights = (params["conv1"][0], params["conv1"][1],
               params["conv2"][0], params["conv2"][1],
               params["conv3"][0], params["conv3"][1],
               params["wqkv"], params["bqkv"],
               params["fc1"][0], params["fc1"][1],
               params["fc2"][0], params["fc2"][1],
               params["fc3"][0], params["fc3"][1])

    vmem_full = pl.BlockSpec(memory_space=pltpu.MemorySpace.VMEM)     # whole array, resident
    in_specs = ([pl.BlockSpec((block_b, S, Cin), lambda b: (b, 0, 0))]
                + [vmem_full] * len(weights))
    out_spec = pl.BlockSpec((block_b, 1), lambda b: (b, 0))

    # Rough per-step working-set budget (widest activations + fused conv input +
    # S x S scores) with double-buffer headroom, clamped to a safe range.
    # TODO(synk): re-derive this budget for large B/S on v7x (64 MiB physical VMEM).
    est = 4 * block_b * S * (3 * 128 + 3 * 128 + S) * 4
    vmem_limit = int(min(32 * 1024 * 1024, max(4 * 1024 * 1024, est)))

    return pl.pallas_call(
        _disc_kernel,
        out_shape=jax.ShapeDtypeStruct((B, 1), jnp.float32),
        grid=(nb,),
        in_specs=in_specs,
        out_specs=out_spec,
        compiler_params=pltpu.CompilerParams(
            dimension_semantics=("parallel",),        # v7x: shard batch grid across TCs
            vmem_limit_bytes=vmem_limit),
    )(x, *weights)


# ---------------------------------------------------------------------------
# Parameter construction (deterministic, synthetic; PyTorch-equivalent folding)
# ---------------------------------------------------------------------------

def init_params(key, input_dim, hidden_dim=128, attention_dim=64):
    keys = iter(jax.random.split(key, 32))

    def w(shape, scale=0.1):
        return jax.random.normal(next(keys), shape, jnp.float32) * scale

    def fold_bn(W, b, eps=1e-5):
        # Eval-mode BatchNorm1d with running_mean=0, running_var=1, gamma=1, beta=0
        # folded into the preceding conv/linear (scale only at these defaults).
        scale = 1.0 / jnp.sqrt(1.0 + eps)
        return W * scale, b * scale

    def spectral_normalize(W):
        # TODO(synk): PyTorch spectral_norm uses a running power-iteration estimate of
        # sigma; here we use the exact largest singular value (its converged value).
        sigma = jnp.linalg.norm(W, ord=2)
        return W / sigma

    def mm(W):                      # MXU-operand dtype (f32 accumulation in-kernel)
        return W.astype(jnp.bfloat16)

    p = {}

    def conv_params(cin, cout, fold=False):
        taps = w((3, cin, cout))               # tap k multiplies x[t + k - 1]
        b = w((cout,), 0.01)
        if fold:
            taps, b = fold_bn(taps, b)
        wk = jnp.concatenate([taps[0], taps[1], taps[2]], axis=0)   # (3*cin, cout)
        return mm(wk), b.reshape(1, cout)

    p["conv1"] = conv_params(input_dim, 32)
    p["conv2"] = conv_params(32, 64, fold=True)
    p["conv3"] = conv_params(64, 128, fold=True)

    # TemporalAttention on 128 features: fused, 128-aligned [Wq_pad | Wk_pad | Wv].
    D, A = 128, attention_dim
    scale = 1.0 / math.sqrt(A)                 # folded into W_q / b_q (A stays 64)
    wq, bq = w((D, A)) * scale, w((A,), 0.01) * scale
    wk_, bk = w((D, A)), w((A,), 0.01)
    wv, bv = w((D, D)), w((D,), 0.01)
    pad2 = ((0, 0), (0, D - A))
    wq_p, wk_p = jnp.pad(wq, pad2), jnp.pad(wk_, pad2)
    bq_p, bk_p = jnp.pad(bq, (0, D - A)), jnp.pad(bk, (0, D - A))
    p["wqkv"] = mm(jnp.concatenate([wq_p, wk_p, wv], axis=1))        # (128, 384)
    p["bqkv"] = jnp.concatenate([bq_p, bk_p, bv]).reshape(1, 3 * D)

    # Classifier: spectral_norm applied, BatchNorm folded.
    H2, H = 2 * hidden_dim, hidden_dim
    wc1, bc1 = fold_bn(spectral_normalize(w((D, H2))), w((H2,), 0.01))
    wc2, bc2 = fold_bn(spectral_normalize(w((H2, H))), w((H,), 0.01))
    wc3, bc3 = spectral_normalize(w((H, 1))), w((1,), 0.01)
    p["fc1"] = (mm(wc1), bc1.reshape(1, H2))
    p["fc2"] = (mm(wc2), bc2.reshape(1, H))
    p["fc3"] = (mm(wc3), bc3.reshape(1, 1))
    return p


# ---------------------------------------------------------------------------
# Main
# ---------------------------------------------------------------------------

if __name__ == "__main__":
    B, S, D_IN = 16, 8, 4          # batch (8-aligned for the batch grid), seq_len, input_dim
    HIDDEN = 32                    # discriminator hidden_dim (classifier widths 64 -> 32 -> 1)

    root = jax.random.PRNGKey(0)
    k_params, k_x = jax.random.split(root)

    params = init_params(k_params, D_IN, hidden_dim=HIDDEN, attention_dim=64)
    x = jax.random.normal(k_x, (B, S, D_IN), jnp.float32)

    out = discriminator_forward(params, x)
    jax.block_until_ready(out)

    assert out.shape == (B, 1)
    assert bool(jnp.all(jnp.isfinite(out)))
    assert bool(jnp.all((out >= 0.0) & (out <= 1.0)))   # sigmoid output

    print("KERNEL_OK")
</pallas_src>

<mosaic_0001>
module attributes {stable_mosaic.version = 11 : i64} {
  func.func @_disc_kernel(%arg0: i32, %arg1: memref<8x8x4xf32, #tpu.memory_space<vmem>>, %arg2: memref<12x32xbf16, #tpu.memory_space<vmem>>, %arg3: memref<1x32xf32, #tpu.memory_space<vmem>>, %arg4: memref<96x64xbf16, #tpu.memory_space<vmem>>, %arg5: memref<1x64xf32, #tpu.memory_space<vmem>>, %arg6: memref<192x128xbf16, #tpu.memory_space<vmem>>, %arg7: memref<1x128xf32, #tpu.memory_space<vmem>>, %arg8: memref<128x384xbf16, #tpu.memory_space<vmem>>, %arg9: memref<1x384xf32, #tpu.memory_space<vmem>>, %arg10: memref<128x64xbf16, #tpu.memory_space<vmem>>, %arg11: memref<1x64xf32, #tpu.memory_space<vmem>>, %arg12: memref<64x32xbf16, #tpu.memory_space<vmem>>, %arg13: memref<1x32xf32, #tpu.memory_space<vmem>>, %arg14: memref<32x1xbf16, #tpu.memory_space<vmem>>, %arg15: memref<1x1xf32, #tpu.memory_space<vmem>>, %arg16: memref<8x1xf32, #tpu.memory_space<vmem>>) attributes {dimension_semantics = [#tpu.dimension_semantics<parallel>], iteration_bounds = array<i64: 2>, scalar_prefetch = 0 : i64, scratch_operands = 0 : i64, tpu.core_type = #tpu.core_type<tc>, window_params = [{transform_indices = @transform_0, window_bounds = array<i64: 8, 8, 4>}, {pipeline_mode = #tpu.pipeline_mode<synchronous>, transform_indices = @transform_1, window_bounds = array<i64: 12, 32>}, {pipeline_mode = #tpu.pipeline_mode<synchronous>, transform_indices = @transform_2, window_bounds = array<i64: 1, 32>}, {pipeline_mode = #tpu.pipeline_mode<synchronous>, transform_indices = @transform_3, window_bounds = array<i64: 96, 64>}, {pipeline_mode = #tpu.pipeline_mode<synchronous>, transform_indices = @transform_4, window_bounds = array<i64: 1, 64>}, {pipeline_mode = #tpu.pipeline_mode<synchronous>, transform_indices = @transform_5, window_bounds = array<i64: 192, 128>}, {pipeline_mode = #tpu.pipeline_mode<synchronous>, transform_indices = @transform_6, window_bounds = array<i64: 1, 128>}, {pipeline_mode = #tpu.pipeline_mode<synchronous>, transform_indices = @transform_7, window_bounds = array<i64: 128, 384>}, {pipeline_mode = #tpu.pipeline_mode<synchronous>, transform_indices = @transform_8, window_bounds = array<i64: 1, 384>}, {pipeline_mode = #tpu.pipeline_mode<synchronous>, transform_indices = @transform_9, window_bounds = array<i64: 128, 64>}, {pipeline_mode = #tpu.pipeline_mode<synchronous>, transform_indices = @transform_10, window_bounds = array<i64: 1, 64>}, {pipeline_mode = #tpu.pipeline_mode<synchronous>, transform_indices = @transform_11, window_bounds = array<i64: 64, 32>}, {pipeline_mode = #tpu.pipeline_mode<synchronous>, transform_indices = @transform_12, window_bounds = array<i64: 1, 32>}, {pipeline_mode = #tpu.pipeline_mode<synchronous>, transform_indices = @transform_13, window_bounds = array<i64: 32, 1>}, {pipeline_mode = #tpu.pipeline_mode<synchronous>, transform_indices = @transform_14, window_bounds = array<i64: 1, 1>}, {transform_indices = @transform_15, window_bounds = array<i64: 8, 1>}]} {
    %0 = tpu.iota {dimensions = array<i32: 0>} : vector<64x1xi32>
    %c8_i32 = arith.constant 8 : i32
    %c0_i32 = arith.constant 0 : i32
    %1 = arith.cmpi eq, %c8_i32, %c0_i32 : i32
    %c1_i32 = arith.constant 1 : i32
    %2 = arith.select %1, %c1_i32, %c8_i32 : i32
    %3 = vector.broadcast %2 : i32 to vector<64x1xi32>
    %4 = arith.remsi %0, %3 : vector<64x1xi32>
    %c0_i32_0 = arith.constant 0 : i32
    %5 = vector.broadcast %c0_i32_0 : i32 to vector<64x1xi32>
    %6 = arith.cmpi ne, %4, %5 : vector<64x1xi32>
    %c0_i32_1 = arith.constant 0 : i32
    %7 = vector.broadcast %c0_i32_1 : i32 to vector<64x1xi32>
    %8 = arith.cmpi slt, %4, %7 : vector<64x1xi32>
    %c0_i32_2 = arith.constant 0 : i32
    %9 = arith.cmpi slt, %2, %c0_i32_2 : i32
    %10 = vector.broadcast %9 : i1 to vector<64x1xi1>
    %11 = vector.broadcast %10 : vector<64x1xi1> to vector<64x1xi1>
    %12 = arith.xori %8, %11 : vector<64x1xi1>
    %13 = arith.andi %12, %6 : vector<64x1xi1>
    %14 = vector.broadcast %2 : i32 to vector<64x1xi32>
    %15 = arith.addi %4, %14 : vector<64x1xi32>
    %16 = arith.select %13, %15, %4 : vector<64x1xi1>, vector<64x1xi32>
    %c0_i32_3 = arith.constant 0 : i32
    %17 = vector.broadcast %c0_i32_3 : i32 to vector<64x1xi32>
    %18 = arith.cmpi ne, %16, %17 : vector<64x1xi32>
    %c7_i32 = arith.constant 7 : i32
    %19 = vector.broadcast %c7_i32 : i32 to vector<64x1xi32>
    %20 = arith.cmpi ne, %16, %19 : vector<64x1xi32>
    %c0 = arith.constant 0 : index
    %c0_4 = arith.constant 0 : index
    %c0_5 = arith.constant 0 : index
    %21 = vector.load %arg1[%c0, %c0_4, %c0_5] : memref<8x8x4xf32, #tpu.memory_space<vmem>>, vector<8x8x4xf32>
    %22 = vector.shape_cast %21 : vector<8x8x4xf32> to vector<64x4xf32>
    %c1_i32_6 = arith.constant 1 : i32
    %23 = tpu.dynamic_rotate %22 by %c1_i32_6 dim 0 : vector<64x4xf32>, i32 -> vector<64x4xf32>
    %cst = arith.constant 0.000000e+00 : f32
    %24 = vector.shape_cast %18 : vector<64x1xi1> to vector<64x1xi1>
    %25 = vector.broadcast %24 : vector<64x1xi1> to vector<64x4xi1>
    %26 = vector.broadcast %cst : f32 to vector<64x4xf32>
    %27 = arith.select %25, %23, %26 : vector<64x4xi1>, vector<64x4xf32>
    %c63_i32 = arith.constant 63 : i32
    %28 = tpu.dynamic_rotate %22 by %c63_i32 dim 0 : vector<64x4xf32>, i32 -> vector<64x4xf32>
    %cst_7 = arith.constant 0.000000e+00 : f32
    %29 = vector.shape_cast %20 : vector<64x1xi1> to vector<64x1xi1>
    %30 = vector.broadcast %29 : vector<64x1xi1> to vector<64x4xi1>
    %31 = vector.broadcast %cst_7 : f32 to vector<64x4xf32>
    %32 = arith.select %30, %28, %31 : vector<64x4xi1>, vector<64x4xf32>
    %33 = tpu.concatenate %27, %22, %32 in 1 : vector<64x4xf32>, vector<64x4xf32>, vector<64x4xf32> -> vector<64x12xf32>
    %34 = arith.truncf %33 : vector<64x12xf32> to vector<64x12xbf16>
    %c0_8 = arith.constant 0 : index
    %c0_9 = arith.constant 0 : index
    %35 = vector.load %arg2[%c0_8, %c0_9] : memref<12x32xbf16, #tpu.memory_space<vmem>>, vector<12x32xbf16>
    %cst_10 = arith.constant dense<0.000000e+00> : vector<64x32xf32>
    %36 = tpu.matmul %34, %35, %cst_10 {dimension_numbers = #tpu.dot_dimension_numbers<[1], [0], [0], [1], [0, 0, 1, 1], [], []>} : vector<64x12xbf16>, vector<12x32xbf16>, vector<64x32xf32> -> vector<64x32xf32>
    %c0_11 = arith.constant 0 : index
    %c0_12 = arith.constant 0 : index
    %37 = vector.load %arg3[%c0_11, %c0_12] : memref<1x32xf32, #tpu.memory_space<vmem>>, vector<1x32xf32>
    %38 = vector.broadcast %37 : vector<1x32xf32> to vector<64x32xf32>
    %39 = arith.addf %36, %38 : vector<64x32xf32>
    %cst_13 = arith.constant 0.000000e+00 : f32
    %40 = vector.broadcast %cst_13 : f32 to vector<64x32xf32>
    %41 = arith.cmpf ogt, %39, %40 : vector<64x32xf32>
    %cst_14 = arith.constant 2.000000e-01 : f32
    %42 = vector.broadcast %cst_14 : f32 to vector<64x32xf32>
    %43 = arith.mulf %42, %39 : vector<64x32xf32>
    %44 = arith.select %41, %39, %43 : vector<64x32xi1>, vector<64x32xf32>
    %c1_i32_15 = arith.constant 1 : i32
    %45 = tpu.dynamic_rotate %44 by %c1_i32_15 dim 0 : vector<64x32xf32>, i32 -> vector<64x32xf32>
    %cst_16 = arith.constant 0.000000e+00 : f32
    %46 = vector.shape_cast %18 : vector<64x1xi1> to vector<64x1xi1>
    %47 = vector.broadcast %46 : vector<64x1xi1> to vector<64x32xi1>
    %48 = vector.broadcast %cst_16 : f32 to vector<64x32xf32>
    %49 = arith.select %47, %45, %48 : vector<64x32xi1>, vector<64x32xf32>
    %c63_i32_17 = arith.constant 63 : i32
    %50 = tpu.dynamic_rotate %44 by %c63_i32_17 dim 0 : vector<64x32xf32>, i32 -> vector<64x32xf32>
    %cst_18 = arith.constant 0.000000e+00 : f32
    %51 = vector.shape_cast %20 : vector<64x1xi1> to vector<64x1xi1>
    %52 = vector.broadcast %51 : vector<64x1xi1> to vector<64x32xi1>
    %53 = vector.broadcast %cst_18 : f32 to vector<64x32xf32>
    %54 = arith.select %52, %50, %53 : vector<64x32xi1>, vector<64x32xf32>
    %55 = tpu.concatenate %49, %44, %54 in 1 : vector<64x32xf32>, vector<64x32xf32>, vector<64x32xf32> -> vector<64x96xf32>
    %56 = arith.truncf %55 : vector<64x96xf32> to vector<64x96xbf16>
    %c0_19 = arith.constant 0 : index
    %c0_20 = arith.constant 0 : index
    %57 = vector.load %arg4[%c0_19, %c0_20] : memref<96x64xbf16, #tpu.memory_space<vmem>>, vector<96x64xbf16>
    %cst_21 = arith.constant dense<0.000000e+00> : vector<64x64xf32>
    %58 = tpu.matmul %56, %57, %cst_21 {dimension_numbers = #tpu.dot_dimension_numbers<[1], [0], [0], [1], [0, 0, 1, 1], [], []>} : vector<64x96xbf16>, vector<96x64xbf16>, vector<64x64xf32> -> vector<64x64xf32>
    %c0_22 = arith.constant 0 : index
    %c0_23 = arith.constant 0 : index
    %59 = vector.load %arg5[%c0_22, %c0_23] : memref<1x64xf32, #tpu.memory_space<vmem>>, vector<1x64xf32>
    %60 = vector.broadcast %59 : vector<1x64xf32> to vector<64x64xf32>
    %61 = arith.addf %58, %60 : vector<64x64xf32>
    %cst_24 = arith.constant 0.000000e+00 : f32
    %62 = vector.broadcast %cst_24 : f32 to vector<64x64xf32>
    %63 = arith.cmpf ogt, %61, %62 : vector<64x64xf32>
    %cst_25 = arith.constant 2.000000e-01 : f32
    %64 = vector.broadcast %cst_25 : f32 to vector<64x64xf32>
    %65 = arith.mulf %64, %61 : vector<64x64xf32>
    %66 = arith.select %63, %61, %65 : vector<64x64xi1>, vector<64x64xf32>
    %c1_i32_26 = arith.constant 1 : i32
    %67 = tpu.dynamic_rotate %66 by %c1_i32_26 dim 0 : vector<64x64xf32>, i32 -> vector<64x64xf32>
    %cst_27 = arith.constant 0.000000e+00 : f32
    %68 = vector.shape_cast %18 : vector<64x1xi1> to vector<64x1xi1>
    %69 = vector.broadcast %68 : vector<64x1xi1> to vector<64x64xi1>
    %70 = vector.broadcast %cst_27 : f32 to vector<64x64xf32>
    %71 = arith.select %69, %67, %70 : vector<64x64xi1>, vector<64x64xf32>
    %c63_i32_28 = arith.constant 63 : i32
    %72 = tpu.dynamic_rotate %66 by %c63_i32_28 dim 0 : vector<64x64xf32>, i32 -> vector<64x64xf32>
    %cst_29 = arith.constant 0.000000e+00 : f32
    %73 = vector.shape_cast %20 : vector<64x1xi1> to vector<64x1xi1>
    %74 = vector.broadcast %73 : vector<64x1xi1> to vector<64x64xi1>
    %75 = vector.broadcast %cst_29 : f32 to vector<64x64xf32>
    %76 = arith.select %74, %72, %75 : vector<64x64xi1>, vector<64x64xf32>
    %77 = tpu.concatenate %71, %66, %76 in 1 : vector<64x64xf32>, vector<64x64xf32>, vector<64x64xf32> -> vector<64x192xf32>
    %78 = arith.truncf %77 : vector<64x192xf32> to vector<64x192xbf16>
    %c0_30 = arith.constant 0 : index
    %c0_31 = arith.constant 0 : index
    %79 = vector.load %arg6[%c0_30, %c0_31] : memref<192x128xbf16, #tpu.memory_space<vmem>>, vector<192x128xbf16>
    %cst_32 = arith.constant dense<0.000000e+00> : vector<64x128xf32>
    %80 = tpu.matmul %78, %79, %cst_32 {dimension_numbers = #tpu.dot_dimension_numbers<[1], [0], [0], [1], [0, 0, 1, 1], [], []>} : vector<64x192xbf16>, vector<192x128xbf16>, vector<64x128xf32> -> vector<64x128xf32>
    %c0_33 = arith.constant 0 : index
    %c0_34 = arith.constant 0 : index
    %81 = vector.load %arg7[%c0_33, %c0_34] : memref<1x128xf32, #tpu.memory_space<vmem>>, vector<1x128xf32>
    %82 = vector.broadcast %81 : vector<1x128xf32> to vector<64x128xf32>
    %83 = arith.addf %80, %82 : vector<64x128xf32>
    %cst_35 = arith.constant 0.000000e+00 : f32
    %84 = vector.broadcast %cst_35 : f32 to vector<64x128xf32>
    %85 = arith.cmpf ogt, %83, %84 : vector<64x128xf32>
    %cst_36 = arith.constant 2.000000e-01 : f32
    %86 = vector.broadcast %cst_36 : f32 to vector<64x128xf32>
    %87 = arith.mulf %86, %83 : vector<64x128xf32>
    %88 = arith.select %85, %83, %87 : vector<64x128xi1>, vector<64x128xf32>
    %89 = arith.truncf %88 : vector<64x128xf32> to vector<64x128xbf16>
    %c0_37 = arith.constant 0 : index
    %c0_38 = arith.constant 0 : index
    %90 = vector.load %arg8[%c0_37, %c0_38] : memref<128x384xbf16, #tpu.memory_space<vmem>>, vector<128x384xbf16>
    %cst_39 = arith.constant dense<0.000000e+00> : vector<64x384xf32>
    %91 = tpu.matmul %89, %90, %cst_39 {dimension_numbers = #tpu.dot_dimension_numbers<[1], [0], [0], [1], [0, 0, 1, 1], [], []>} : vector<64x128xbf16>, vector<128x384xbf16>, vector<64x384xf32> -> vector<64x384xf32>
    %c0_40 = arith.constant 0 : index
    %c0_41 = arith.constant 0 : index
    %92 = vector.load %arg9[%c0_40, %c0_41] : memref<1x384xf32, #tpu.memory_space<vmem>>, vector<1x384xf32>
    %93 = vector.broadcast %92 : vector<1x384xf32> to vector<64x384xf32>
    %94 = arith.addf %91, %93 : vector<64x384xf32>
    %95 = vector.extract_strided_slice %94 {offsets = [0, 0], sizes = [64, 128], strides = [1, 1]} : vector<64x384xf32> to vector<64x128xf32>
    %96 = vector.shape_cast %95 : vector<64x128xf32> to vector<8x8x128xf32>
    %97 = arith.truncf %96 : vector<8x8x128xf32> to vector<8x8x128xbf16>
    %98 = vector.extract_strided_slice %94 {offsets = [0, 128], sizes = [64, 128], strides = [1, 1]} : vector<64x384xf32> to vector<64x128xf32>
    %99 = vector.shape_cast %98 : vector<64x128xf32> to vector<8x8x128xf32>
    %100 = arith.truncf %99 : vector<8x8x128xf32> to vector<8x8x128xbf16>
    %101 = vector.extract_strided_slice %94 {offsets = [0, 256], sizes = [64, 128], strides = [1, 1]} : vector<64x384xf32> to vector<64x128xf32>
    %102 = vector.shape_cast %101 : vector<64x128xf32> to vector<8x8x128xf32>
    "tpu.trace_start"() <{level = 10 : i32, message = "bsa,bta->bst"}> : () -> ()
    %cst_42 = arith.constant dense<0.000000e+00> : vector<8x8x8xf32>
    %103 = tpu.matmul %97, %100, %cst_42 {dimension_numbers = #tpu.dot_dimension_numbers<[2], [2], [1], [1], [0, 0, 0, 1, 1, 1], [0], [0]>} : vector<8x8x128xbf16>, vector<8x8x128xbf16>, vector<8x8x8xf32> -> vector<8x8x8xf32>
    "tpu.trace_stop"() : () -> ()
    %cst_43 = arith.constant dense<0xFF800000> : vector<8x8xf32>
    %104 = vector.multi_reduction <maximumf>, %103, %cst_43 [2] : vector<8x8x8xf32> to vector<8x8xf32>
    %105 = vector.shape_cast %104 : vector<8x8xf32> to vector<8x8x1xf32>
    %106 = vector.broadcast %105 : vector<8x8x1xf32> to vector<8x8x8xf32>
    %107 = arith.subf %103, %106 : vector<8x8x8xf32>
    %108 = math.exp %107 : vector<8x8x8xf32>
    %cst_44 = arith.constant dense<0.000000e+00> : vector<8x8xf32>
    %109 = vector.multi_reduction <add>, %108, %cst_44 [2] : vector<8x8x8xf32> to vector<8x8xf32>
    %110 = vector.shape_cast %109 : vector<8x8xf32> to vector<8x8x1xf32>
    %111 = tpu.reciprocal %110 {approx = true} : vector<8x8x1xf32> -> vector<8x8x1xf32>
    %112 = vector.broadcast %111 : vector<8x8x1xf32> to vector<8x8x8xf32>
    %113 = arith.mulf %108, %112 : vector<8x8x8xf32>
    %cst_45 = arith.constant dense<0.000000e+00> : vector<8x8xf32>
    %114 = vector.multi_reduction <add>, %113, %cst_45 [1] : vector<8x8x8xf32> to vector<8x8xf32>
    %cst_46 = arith.constant 1.250000e-01 : f32
    %115 = vector.broadcast %cst_46 : f32 to vector<8x8xf32>
    %116 = arith.mulf %114, %115 : vector<8x8xf32>
    %117 = vector.shape_cast %116 : vector<8x8xf32> to vector<8x8x1xf32>
    %118 = vector.broadcast %117 : vector<8x8x1xf32> to vector<8x8x128xf32>
    %119 = arith.mulf %118, %102 : vector<8x8x128xf32>
    %cst_47 = arith.constant dense<0.000000e+00> : vector<8x128xf32>
    %120 = vector.multi_reduction <add>, %119, %cst_47 [1] : vector<8x8x128xf32> to vector<8x128xf32>
    %121 = arith.truncf %120 : vector<8x128xf32> to vector<8x128xbf16>
    %c0_48 = arith.constant 0 : index
    %c0_49 = arith.constant 0 : index
    %122 = vector.load %arg10[%c0_48, %c0_49] : memref<128x64xbf16, #tpu.memory_space<vmem>>, vector<128x64xbf16>
    %cst_50 = arith.constant dense<0.000000e+00> : vector<8x64xf32>
    %123 = tpu.matmul %121, %122, %cst_50 {dimension_numbers = #tpu.dot_dimension_numbers<[1], [0], [0], [1], [0, 0, 1, 1], [], []>} : vector<8x128xbf16>, vector<128x64xbf16>, vector<8x64xf32> -> vector<8x64xf32>
    %c0_51 = arith.constant 0 : index
    %c0_52 = arith.constant 0 : index
    %124 = vector.load %arg11[%c0_51, %c0_52] : memref<1x64xf32, #tpu.memory_space<vmem>>, vector<1x64xf32>
    %125 = vector.broadcast %124 : vector<1x64xf32> to vector<8x64xf32>
    %126 = arith.addf %123, %125 : vector<8x64xf32>
    %cst_53 = arith.constant 0.000000e+00 : f32
    %127 = vector.broadcast %cst_53 : f32 to vector<8x64xf32>
    %128 = arith.cmpf ogt, %126, %127 : vector<8x64xf32>
    %cst_54 = arith.constant 2.000000e-01 : f32
    %129 = vector.broadcast %cst_54 : f32 to vector<8x64xf32>
    %130 = arith.mulf %129, %126 : vector<8x64xf32>
    %131 = arith.select %128, %126, %130 : vector<8x64xi1>, vector<8x64xf32>
    %132 = arith.truncf %131 : vector<8x64xf32> to vector<8x64xbf16>
    %c0_55 = arith.constant 0 : index
    %c0_56 = arith.constant 0 : index
    %133 = vector.load %arg12[%c0_55, %c0_56] : memref<64x32xbf16, #tpu.memory_space<vmem>>, vector<64x32xbf16>
    %cst_57 = arith.constant dense<0.000000e+00> : vector<8x32xf32>
    %134 = tpu.matmul %132, %133, %cst_57 {dimension_numbers = #tpu.dot_dimension_numbers<[1], [0], [0], [1], [0, 0, 1, 1], [], []>} : vector<8x64xbf16>, vector<64x32xbf16>, vector<8x32xf32> -> vector<8x32xf32>
    %c0_58 = arith.constant 0 : index
    %c0_59 = arith.constant 0 : index
    %135 = vector.load %arg13[%c0_58, %c0_59] : memref<1x32xf32, #tpu.memory_space<vmem>>, vector<1x32xf32>
    %136 = vector.broadcast %135 : vector<1x32xf32> to vector<8x32xf32>
    %137 = arith.addf %134, %136 : vector<8x32xf32>
    %cst_60 = arith.constant 0.000000e+00 : f32
    %138 = vector.broadcast %cst_60 : f32 to vector<8x32xf32>
    %139 = arith.cmpf ogt, %137, %138 : vector<8x32xf32>
    %cst_61 = arith.constant 2.000000e-01 : f32
    %140 = vector.broadcast %cst_61 : f32 to vector<8x32xf32>
    %141 = arith.mulf %140, %137 : vector<8x32xf32>
    %142 = arith.select %139, %137, %141 : vector<8x32xi1>, vector<8x32xf32>
    %143 = arith.truncf %142 : vector<8x32xf32> to vector<8x32xbf16>
    %c0_62 = arith.constant 0 : index
    %c0_63 = arith.constant 0 : index
    %144 = vector.load %arg14[%c0_62, %c0_63] : memref<32x1xbf16, #tpu.memory_space<vmem>>, vector<32x1xbf16>
    %cst_64 = arith.constant dense<0.000000e+00> : vector<8x1xf32>
    %145 = tpu.matmul %143, %144, %cst_64 {dimension_numbers = #tpu.dot_dimension_numbers<[1], [0], [0], [1], [0, 0, 1, 1], [], []>} : vector<8x32xbf16>, vector<32x1xbf16>, vector<8x1xf32> -> vector<8x1xf32>
    %c0_65 = arith.constant 0 : index
    %c0_66 = arith.constant 0 : index
    %146 = vector.load %arg15[%c0_65, %c0_66] : memref<1x1xf32, #tpu.memory_space<vmem>>, vector<1x1xf32>
    %147 = vector.broadcast %146 : vector<1x1xf32> to vector<8x1xf32>
    %148 = arith.addf %145, %147 : vector<8x1xf32>
    %149 = arith.negf %148 : vector<8x1xf32>
    %150 = math.exp %149 : vector<8x1xf32>
    %cst_67 = arith.constant 1.000000e+00 : f32
    %151 = vector.broadcast %cst_67 : f32 to vector<8x1xf32>
    %152 = arith.addf %151, %150 : vector<8x1xf32>
    %153 = arith.divf %151, %152 : vector<8x1xf32>
    %c0_68 = arith.constant 0 : index
    %c0_69 = arith.constant 0 : index
    %154 = vector.load %arg16[%c0_68, %c0_69] : memref<8x1xf32, #tpu.memory_space<vmem>>, vector<8x1xf32>
    tpu.vector_store %arg16[%c0_68, %c0_69], %153 {strides = array<i32>} : memref<8x1xf32, #tpu.memory_space<vmem>>, vector<8x1xf32>,
    return
  }
  func.func @transform_0(%arg0: i32) -> (i32, i32, i32) {
    %c0_i32 = arith.constant 0 : i32
    %c0_i32_0 = arith.constant 0 : i32
    %c0_i32_1 = arith.constant 0 : i32
    return %arg0, %c0_i32, %c0_i32_0 : i32, i32, i32
  }
  func.func @transform_1(%arg0: i32) -> (i32, i32) {
    %c0_i32 = arith.constant 0 : i32
    %c0_i32_0 = arith.constant 0 : i32
    %c0_i32_1 = arith.constant 0 : i32
    return %c0_i32, %c0_i32_0 : i32, i32
  }
  func.func @transform_2(%arg0: i32) -> (i32, i32) {
    %c0_i32 = arith.constant 0 : i32
    %c0_i32_0 = arith.constant 0 : i32
    %c0_i32_1 = arith.constant 0 : i32
    return %c0_i32, %c0_i32_0 : i32, i32
  }
  func.func @transform_3(%arg0: i32) -> (i32, i32) {
    %c0_i32 = arith.constant 0 : i32
    %c0_i32_0 = arith.constant 0 : i32
    %c0_i32_1 = arith.constant 0 : i32
    return %c0_i32, %c0_i32_0 : i32, i32
  }
  func.func @transform_4(%arg0: i32) -> (i32, i32) {
    %c0_i32 = arith.constant 0 : i32
    %c0_i32_0 = arith.constant 0 : i32
    %c0_i32_1 = arith.constant 0 : i32
    return %c0_i32, %c0_i32_0 : i32, i32
  }
  func.func @transform_5(%arg0: i32) -> (i32, i32) {
    %c0_i32 = arith.constant 0 : i32
    %c0_i32_0 = arith.constant 0 : i32
    %c0_i32_1 = arith.constant 0 : i32
    return %c0_i32, %c0_i32_0 : i32, i32
  }
  func.func @transform_6(%arg0: i32) -> (i32, i32) {
    %c0_i32 = arith.constant 0 : i32
    %c0_i32_0 = arith.constant 0 : i32
    %c0_i32_1 = arith.constant 0 : i32
    return %c0_i32, %c0_i32_0 : i32, i32
  }
  func.func @transform_7(%arg0: i32) -> (i32, i32) {
    %c0_i32 = arith.constant 0 : i32
    %c0_i32_0 = arith.constant 0 : i32
    %c0_i32_1 = arith.constant 0 : i32
    return %c0_i32, %c0_i32_0 : i32, i32
  }
  func.func @transform_8(%arg0: i32) -> (i32, i32) {
    %c0_i32 = arith.constant 0 : i32
    %c0_i32_0 = arith.constant 0 : i32
    %c0_i32_1 = arith.constant 0 : i32
    return %c0_i32, %c0_i32_0 : i32, i32
  }
  func.func @transform_9(%arg0: i32) -> (i32, i32) {
    %c0_i32 = arith.constant 0 : i32
    %c0_i32_0 = arith.constant 0 : i32
    %c0_i32_1 = arith.constant 0 : i32
    return %c0_i32, %c0_i32_0 : i32, i32
  }
  func.func @transform_10(%arg0: i32) -> (i32, i32) {
    %c0_i32 = arith.constant 0 : i32
    %c0_i32_0 = arith.constant 0 : i32
    %c0_i32_1 = arith.constant 0 : i32
    return %c0_i32, %c0_i32_0 : i32, i32
  }
  func.func @transform_11(%arg0: i32) -> (i32, i32) {
    %c0_i32 = arith.constant 0 : i32
    %c0_i32_0 = arith.constant 0 : i32
    %c0_i32_1 = arith.constant 0 : i32
    return %c0_i32, %c0_i32_0 : i32, i32
  }
  func.func @transform_12(%arg0: i32) -> (i32, i32) {
    %c0_i32 = arith.constant 0 : i32
    %c0_i32_0 = arith.constant 0 : i32
    %c0_i32_1 = arith.constant 0 : i32
    return %c0_i32, %c0_i32_0 : i32, i32
  }
  func.func @transform_13(%arg0: i32) -> (i32, i32) {
    %c0_i32 = arith.constant 0 : i32
    %c0_i32_0 = arith.constant 0 : i32
    %c0_i32_1 = arith.constant 0 : i32
    return %c0_i32, %c0_i32_0 : i32, i32
  }
  func.func @transform_14(%arg0: i32) -> (i32, i32) {
    %c0_i32 = arith.constant 0 : i32
    %c0_i32_0 = arith.constant 0 : i32
    %c0_i32_1 = arith.constant 0 : i32
    return %c0_i32, %c0_i32_0 : i32, i32
  }
  func.func @transform_15(%arg0: i32) -> (i32, i32) {
    %c0_i32 = arith.constant 0 : i32
    %c0_i32_0 = arith.constant 0 : i32
    return %arg0, %c0_i32 : i32, i32
  }
}

</mosaic_0001>

<llo_original>
// kernel: discriminator_forward.1
$region0: #{discriminator_forward.1}
  #allocation0 [shape = 'u32[]', space=smem, size = 0x4, offset = 0x4, fixed_abs, tag = 'smem constant byte address 0x4 - core index']
  #allocation1 [shape = 'u32[144,128]{1,0:T(1,128)}', space=vmem, size = 0x12000, scoped, tag = 'internal scratch']
  #allocation2 [shape = 'f32[1,1]{1,0:T(1,128)S(1)}', space=vmem, size = 0x200, scoped, tag = 'scoped memory for discriminator_forward.1']
  %s0 = inlined_call_operand.vmem [shape: f32[16,8,4], index: 0, kind: input, shape index: {}]
  %s1 = inlined_call_operand.vmem [shape: bf16[12,32], index: 1, kind: input, shape index: {}]
  %s2 = inlined_call_operand.vmem [shape: f32[1,32], index: 2, kind: input, shape index: {}]
  %s3 = inlined_call_operand.vmem [shape: bf16[96,64], index: 3, kind: input, shape index: {}]
  %s4 = inlined_call_operand.vmem [shape: f32[1,64], index: 4, kind: input, shape index: {}]
  %s5 = inlined_call_operand.vmem [shape: bf16[192,128], index: 5, kind: input, shape index: {}]
  %s6 = inlined_call_operand.vmem [shape: f32[1,128], index: 6, kind: input, shape index: {}]
  %s7 = inlined_call_operand.vmem [shape: bf16[128,384], index: 7, kind: input, shape index: {}]
  %s8 = inlined_call_operand.vmem [shape: f32[1,384], index: 8, kind: input, shape index: {}]
  %s9 = inlined_call_operand.vmem [shape: bf16[128,64], index: 9, kind: input, shape index: {}]
  %s10 = inlined_call_operand.vmem [shape: f32[1,64], index: 10, kind: input, shape index: {}]
  %s11 = inlined_call_operand.vmem [shape: bf16[64,32], index: 11, kind: input, shape index: {}]
  %s12 = inlined_call_operand.vmem [shape: f32[1,32], index: 12, kind: input, shape index: {}]
  %s13 = inlined_call_operand.vmem [shape: bf16[32,1], index: 13, kind: input, shape index: {}]
  %s14 = inlined_call_operand.<no memory space> [shape: f32[1,1], index: 14, kind: input, shape index: {}]
  %s15 = inlined_call_operand.vmem [shape: f32[16,1], index: 15, kind: output, shape index: {}]
  %s16 = sld [smem:[#allocation0]]
  $region93: #{discriminator_forward.1} parent=0
    _
  %s18 = ssub.s32 1, %s16
  %s19 = scalar_select 0, %s18, %s16
  %v20 = vstv %s14
  %21 = vst [vmem:[#allocation2] sm:$0x1] %v20
  loop: start=0, step=1, limit=4
  $region2: #{discriminator_forward.1} parent=0 // loop_pre_header
    _
  $region3: #{discriminator_forward.1} parent=0 // loop_header
    %s23 = sphi 0, %s27
    %p24 = scmp.ge.s32.totalorder %s23, 4
    %s33 = sphi 0, %s35
    %s36 = sphi 0, %s33
    %s37 = sphi 0, %s36
    %s53 = sphi 0, %s37
    %s57 = sphi 0, %s57
    %s59 = sphi 0, %s57
    %s60 = sphi 0, %s59
    %s74 = sphi 0, %s60
    %s78 = sphi 0, %s78
    %s80 = sphi 0, %s78
    %s81 = sphi 0, %s80
    %s95 = sphi 0, %s81
    %s99 = sphi 0, %s99
    %s101 = sphi 0, %s99
    %s102 = sphi 0, %s101
    %s116 = sphi 0, %s102
    %s120 = sphi 0, %s120
    %s122 = sphi 0, %s120
    %s123 = sphi 0, %s122
    %s137 = sphi 0, %s123
    %s141 = sphi 0, %s141
    %s143 = sphi 0, %s141
    %s144 = sphi 0, %s143
    %s158 = sphi 0, %s144
    %s162 = sphi 0, %s162
    %s164 = sphi 0, %s162
    %s165 = sphi 0, %s164
    %s179 = sphi 0, %s165
    %s183 = sphi 0, %s183
    %s185 = sphi 0, %s183
    %s186 = sphi 0, %s185
    %s200 = sphi 0, %s186
    %s204 = sphi 0, %s204
    %s206 = sphi 0, %s204
    %s207 = sphi 0, %s206
    %s221 = sphi 0, %s207
    %s225 = sphi 0, %s225
    %s227 = sphi 0, %s225
    %s228 = sphi 0, %s227
    %s242 = sphi 0, %s228
    %s246 = sphi 0, %s246
    %s248 = sphi 0, %s246
    %s249 = sphi 0, %s248
    %s263 = sphi 0, %s249
    %s267 = sphi 0, %s267
    %s269 = sphi 0, %s267
    %s270 = sphi 0, %s269
    %s284 = sphi 0, %s270
    %s288 = sphi 0, %s288
    %s290 = sphi 0, %s288
    %s291 = sphi 0, %s290
    %s305 = sphi 0, %s291
    %s309 = sphi 0, %s309
    %s311 = sphi 0, %s309
    %s312 = sphi 0, %s311
    %s326 = sphi 0, %s312
    %s330 = sphi 0, %s330
    %s332 = sphi 0, %s330
    %s333 = sphi 0, %s332
    %s347 = sphi 0, %s333
    %s353 = sphi 0, %s355
    %s356 = sphi 0, %s353
    %s357 = sphi 0, %s356
    %s373 = sphi 0, %s357
  $region4: #{discriminator_forward.1} parent=0 // loop_header_branch
    %26 = sbr.rel (%p24) target = $region8
  $region5: #{discriminator_forward.1} parent=0 // loop_body
    %s28 = ssub.s32 %s23, 1
    %s29 = ssub.s32 %s23, 2
    %s30 = sadd.s32 %s23, 1
    %s31 = ssub.s32 %s23, %s30
    %p32 = scmp.eq.s32.totalorder %s31, 0
    %s34 = sadd.s32 %s33, 1
    %s35 = scalar_select %p32, %s33, %s34
    %p38 = pneg %p32
    %p39 = scmp.eq.s32.totalorder %s23, 1
    %p40 = por %p38, %p39
    %p41 = scmp.ne.s32.totalorder %s33, %s36
    %p42 = scmp.eq.s32.totalorder %s23, 0
    %p43 = por %p41, %p42
    %p44 = scmp.ne.s32.totalorder %s33, %s36
    %p45 = scmp.eq.s32.totalorder %s28, 1
    %p46 = por %p44, %p45
    %p47 = scmp.ne.s32.totalorder %s36, %s37
    %p48 = scmp.eq.s32.totalorder %s28, 0
    %p49 = por %p47, %p48
    %p50 = scmp.ne.s32.totalorder %s36, %s37
    %p51 = scmp.eq.s32.totalorder %s29, 1
    %p52 = por %p50, %p51
    %p54 = scmp.ne.s32.totalorder %s37, %s53
    %p55 = scmp.eq.s32.totalorder %s29, 0
    %p56 = por %p54, %p55
    %s58 = sadd.s32 %s57, 1
    %p61 = scmp.eq.s32.totalorder %s23, 1
    %p62 = scmp.ne.s32.totalorder %s57, %s59
    %p63 = scmp.eq.s32.totalorder %s23, 0
    %p64 = por %p62, %p63
    %p65 = scmp.ne.s32.totalorder %s57, %s59
    %p66 = scmp.eq.s32.totalorder %s28, 1
    %p67 = por %p65, %p66
    %p68 = scmp.ne.s32.totalorder %s59, %s60
    %p69 = scmp.eq.s32.totalorder %s28, 0
    %p70 = por %p68, %p69
    %p71 = scmp.ne.s32.totalorder %s59, %s60
    %p72 = scmp.eq.s32.totalorder %s29, 1
    %p73 = por %p71, %p72
    %p75 = scmp.ne.s32.totalorder %s60, %s74
    %p76 = scmp.eq.s32.totalorder %s29, 0
    %p77 = por %p75, %p76
    %s79 = sadd.s32 %s78, 1
    %p82 = scmp.eq.s32.totalorder %s23, 1
    %p83 = scmp.ne.s32.totalorder %s78, %s80
    %p84 = scmp.eq.s32.totalorder %s23, 0
    %p85 = por %p83, %p84
    %p86 = scmp.ne.s32.totalorder %s78, %s80
    %p87 = scmp.eq.s32.totalorder %s28, 1
    %p88 = por %p86, %p87
    %p89 = scmp.ne.s32.totalorder %s80, %s81
    %p90 = scmp.eq.s32.totalorder %s28, 0
    %p91 = por %p89, %p90
    %p92 = scmp.ne.s32.totalorder %s80, %s81
    %p93 = scmp.eq.s32.totalorder %s29, 1
    %p94 = por %p92, %p93
    %p96 = scmp.ne.s32.totalorder %s81, %s95
    %p97 = scmp.eq.s32.totalorder %s29, 0
    %p98 = por %p96, %p97
    %s100 = sadd.s32 %s99, 1
    %p103 = scmp.eq.s32.totalorder %s23, 1
    %p104 = scmp.ne.s32.totalorder %s99, %s101
    %p105 = scmp.eq.s32.totalorder %s23, 0
    %p106 = por %p104, %p105
    %p107 = scmp.ne.s32.totalorder %s99, %s101
    %p108 = scmp.eq.s32.totalorder %s28, 1
    %p109 = por %p107, %p108
    %p110 = scmp.ne.s32.totalorder %s101, %s102
    %p111 = scmp.eq.s32.totalorder %s28, 0
    %p112 = por %p110, %p111
    %p113 = scmp.ne.s32.totalorder %s101, %s102
    %p114 = scmp.eq.s32.totalorder %s29, 1
    %p115 = por %p113, %p114
    %p117 = scmp.ne.s32.totalorder %s102, %s116
    %p118 = scmp.eq.s32.totalorder %s29, 0
    %p119 = por %p117, %p118
    %s121 = sadd.s32 %s120, 1
    %p124 = scmp.eq.s32.totalorder %s23, 1
    %p125 = scmp.ne.s32.totalorder %s120, %s122
    %p126 = scmp.eq.s32.totalorder %s23, 0
    %p127 = por %p125, %p126
    %p128 = scmp.ne.s32.totalorder %s120, %s122
    %p129 = scmp.eq.s32.totalorder %s28, 1
    %p130 = por %p128, %p129
    %p131 = scmp.ne.s32.totalorder %s122, %s123
    %p132 = scmp.eq.s32.totalorder %s28, 0
    %p133 = por %p131, %p132
    %p134 = scmp.ne.s32.totalorder %s122, %s123
    %p135 = scmp.eq.s32.totalorder %s29, 1
    %p136 = por %p134, %p135
    %p138 = scmp.ne.s32.totalorder %s123, %s137
    %p139 = scmp.eq.s32.totalorder %s29, 0
    %p140 = por %p138, %p139
    %s142 = sadd.s32 %s141, 1
    %p145 = scmp.eq.s32.totalorder %s23, 1
    %p146 = scmp.ne.s32.totalorder %s141, %s143
    %p147 = scmp.eq.s32.totalorder %s23, 0
    %p148 = por %p146, %p147
    %p149 = scmp.ne.s32.totalorder %s141, %s143
    %p150 = scmp.eq.s32.totalorder %s28, 1
    %p151 = por %p149, %p150
    %p152 = scmp.ne.s32.totalorder %s143, %s144
    %p153 = scmp.eq.s32.totalorder %s28, 0
    %p154 = por %p152, %p153
    %p155 = scmp.ne.s32.totalorder %s143, %s144
    %p156 = scmp.eq.s32.totalorder %s29, 1
    %p157 = por %p155, %p156
    %p159 = scmp.ne.s32.totalorder %s144, %s158
    %p160 = scmp.eq.s32.totalorder %s29, 0
    %p161 = por %p159, %p160
    %s163 = sadd.s32 %s162, 1
    %p166 = scmp.eq.s32.totalorder %s23, 1
    %p167 = scmp.ne.s32.totalorder %s162, %s164
    %p168 = scmp.eq.s32.totalorder %s23, 0
    %p169 = por %p167, %p168
    %p170 = scmp.ne.s32.totalorder %s162, %s164
    %p171 = scmp.eq.s32.totalorder %s28, 1
    %p172 = por %p170, %p171
    %p173 = scmp.ne.s32.totalorder %s164, %s165
    %p174 = scmp.eq.s32.totalorder %s28, 0
    %p175 = por %p173, %p174
    %p176 = scmp.ne.s32.totalorder %s164, %s165
    %p177 = scmp.eq.s32.totalorder %s29, 1
    %p178 = por %p176, %p177
    %p180 = scmp.ne.s32.totalorder %s165, %s179
    %p181 = scmp.eq.s32.totalorder %s29, 0
    %p182 = por %p180, %p181
    %s184 = sadd.s32 %s183, 1
    %p187 = scmp.eq.s32.totalorder %s23, 1
    %p188 = scmp.ne.s32.totalorder %s183, %s185
    %p189 = scmp.eq.s32.totalorder %s23, 0
    %p190 = por %p188, %p189
    %p191 = scmp.ne.s32.totalorder %s183, %s185
    %p192 = scmp.eq.s32.totalorder %s28, 1
    %p193 = por %p191, %p192
    %p194 = scmp.ne.s32.totalorder %s185, %s186
    %p195 = scmp.eq.s32.totalorder %s28, 0
    %p196 = por %p194, %p195
    %p197 = scmp.ne.s32.totalorder %s185, %s186
    %p198 = scmp.eq.s32.totalorder %s29, 1
    %p199 = por %p197, %p198
    %p201 = scmp.ne.s32.totalorder %s186, %s200
    %p202 = scmp.eq.s32.totalorder %s29, 0
    %p203 = por %p201, %p202
    %s205 = sadd.s32 %s204, 1
    %p208 = scmp.eq.s32.totalorder %s23, 1
    %p209 = scmp.ne.s32.totalorder %s204, %s206
    %p210 = scmp.eq.s32.totalorder %s23, 0
    %p211 = por %p209, %p210
    %p212 = scmp.ne.s32.totalorder %s204, %s206
    %p213 = scmp.eq.s32.totalorder %s28, 1
    %p214 = por %p212, %p213
    %p215 = scmp.ne.s32.totalorder %s206, %s207
    %p216 = scmp.eq.s32.totalorder %s28, 0
    %p217 = por %p215, %p216
    %p218 = scmp.ne.s32.totalorder %s206, %s207
    %p219 = scmp.eq.s32.totalorder %s29, 1
    %p220 = por %p218, %p219
    %p222 = scmp.ne.s32.totalorder %s207, %s221
    %p223 = scmp.eq.s32.totalorder %s29, 0
    %p224 = por %p222, %p223
    %s226 = sadd.s32 %s225, 1
    %p229 = scmp.eq.s32.totalorder %s23, 1
    %p230 = scmp.ne.s32.totalorder %s225, %s227
    %p231 = scmp.eq.s32.totalorder %s23, 0
    %p232 = por %p230, %p231
    %p233 = scmp.ne.s32.totalorder %s225, %s227
    %p234 = scmp.eq.s32.totalorder %s28, 1
    %p235 = por %p233, %p234
    %p236 = scmp.ne.s32.totalorder %s227, %s228
    %p237 = scmp.eq.s32.totalorder %s28, 0
    %p238 = por %p236, %p237
    %p239 = scmp.ne.s32.totalorder %s227, %s228
    %p240 = scmp.eq.s32.totalorder %s29, 1
    %p241 = por %p239, %p240
    %p243 = scmp.ne.s32.totalorder %s228, %s242
    %p244 = scmp.eq.s32.totalorder %s29, 0
    %p245 = por %p243, %p244
    %s247 = sadd.s32 %s246, 1
    %p250 = scmp.eq.s32.totalorder %s23, 1
    %p251 = scmp.ne.s32.totalorder %s246, %s248
    %p252 = scmp.eq.s32.totalorder %s23, 0
    %p253 = por %p251, %p252
    %p254 = scmp.ne.s32.totalorder %s246, %s248
    %p255 = scmp.eq.s32.totalorder %s28, 1
    %p256 = por %p254, %p255
    %p257 = scmp.ne.s32.totalorder %s248, %s249
    %p258 = scmp.eq.s32.totalorder %s28, 0
    %p259 = por %p257, %p258
    %p260 = scmp.ne.s32.totalorder %s248, %s249
    %p261 = scmp.eq.s32.totalorder %s29, 1
    %p262 = por %p260, %p261
    %p264 = scmp.ne.s32.totalorder %s249, %s263
    %p265 = scmp.eq.s32.totalorder %s29, 0
    %p266 = por %p264, %p265
    %s268 = sadd.s32 %s267, 1
    %p271 = scmp.eq.s32.totalorder %s23, 1
    %p272 = scmp.ne.s32.totalorder %s267, %s269
    %p273 = scmp.eq.s32.totalorder %s23, 0
    %p274 = por %p272, %p273
    %p275 = scmp.ne.s32.totalorder %s267, %s269
    %p276 = scmp.eq.s32.totalorder %s28, 1
    %p277 = por %p275, %p276
    %p278 = scmp.ne.s32.totalorder %s269, %s270
    %p279 = scmp.eq.s32.totalorder %s28, 0
    %p280 = por %p278, %p279
    %p281 = scmp.ne.s32.totalorder %s269, %s270
    %p282 = scmp.eq.s32.totalorder %s29, 1
    %p283 = por %p281, %p282
    %p285 = scmp.ne.s32.totalorder %s270, %s284
    %p286 = scmp.eq.s32.totalorder %s29, 0
    %p287 = por %p285, %p286
    %s289 = sadd.s32 %s288, 1
    %p292 = scmp.eq.s32.totalorder %s23, 1
    %p293 = scmp.ne.s32.totalorder %s288, %s290
    %p294 = scmp.eq.s32.totalorder %s23, 0
    %p295 = por %p293, %p294
    %p296 = scmp.ne.s32.totalorder %s288, %s290
    %p297 = scmp.eq.s32.totalorder %s28, 1
    %p298 = por %p296, %p297
    %p299 = scmp.ne.s32.totalorder %s290, %s291
    %p300 = scmp.eq.s32.totalorder %s28, 0
    %p301 = por %p299, %p300
    %p302 = scmp.ne.s32.totalorder %s290, %s291
    %p303 = scmp.eq.s32.totalorder %s29, 1
    %p304 = por %p302, %p303
    %p306 = scmp.ne.s32.totalorder %s291, %s305
    %p307 = scmp.eq.s32.totalorder %s29, 0
    %p308 = por %p306, %p307
    %s310 = sadd.s32 %s309, 1
    %p313 = scmp.eq.s32.totalorder %s23, 1
    %p314 = scmp.ne.s32.totalorder %s309, %s311
    %p315 = scmp.eq.s32.totalorder %s23, 0
    %p316 = por %p314, %p315
    %p317 = scmp.ne.s32.totalorder %s309, %s311
    %p318 = scmp.eq.s32.totalorder %s28, 1
    %p319 = por %p317, %p318
    %p320 = scmp.ne.s32.totalorder %s311, %s312
    %p321 = scmp.eq.s32.totalorder %s28, 0
    %p322 = por %p320, %p321
    %p323 = scmp.ne.s32.totalorder %s311, %s312
    %p324 = scmp.eq.s32.totalorder %s29, 1
    %p325 = por %p323, %p324
    %p327 = scmp.ne.s32.totalorder %s312, %s326
    %p328 = scmp.eq.s32.totalorder %s29, 0
    %p329 = por %p327, %p328
    %s331 = sadd.s32 %s330, 1
    %p334 = scmp.eq.s32.totalorder %s23, 1
    %p335 = scmp.ne.s32.totalorder %s330, %s332
    %p336 = scmp.eq.s32.totalorder %s23, 0
    %p337 = por %p335, %p336
    %p338 = scmp.ne.s32.totalorder %s330, %s332
    %p339 = scmp.eq.s32.totalorder %s28, 1
    %p340 = por %p338, %p339
    %p341 = scmp.ne.s32.totalorder %s332, %s333
    %p342 = scmp.eq.s32.totalorder %s28, 0
    %p343 = por %p341, %p342
    %p344 = scmp.ne.s32.totalorder %s332, %s333
    %p345 = scmp.eq.s32.totalorder %s29, 1
    %p346 = por %p344, %p345
    %p348 = scmp.ne.s32.totalorder %s333, %s347
    %p349 = scmp.eq.s32.totalorder %s29, 0
    %p350 = por %p348, %p349
    %s351 = ssub.s32 %s23, %s30
    %p352 = scmp.eq.s32.totalorder %s351, 0
    %s354 = sadd.s32 %s353, 1
    %s355 = scalar_select %p352, %s353, %s354
    %p358 = pneg %p352
    %p359 = scmp.eq.s32.totalorder %s23, 1
    %p360 = por %p358, %p359
    %p361 = scmp.ne.s32.totalorder %s353, %s356
    %p362 = scmp.eq.s32.totalorder %s23, 0
    %p363 = por %p361, %p362
    %p364 = scmp.ne.s32.totalorder %s353, %s356
    %p365 = scmp.eq.s32.totalorder %s28, 1
    %p366 = por %p364, %p365
    %p367 = scmp.ne.s32.totalorder %s356, %s357
    %p368 = scmp.eq.s32.totalorder %s28, 0
    %p369 = por %p367, %p368
    %p370 = scmp.ne.s32.totalorder %s356, %s357
    %p371 = scmp.eq.s32.totalorder %s29, 1
    %p372 = por %p370, %p371
    %p374 = scmp.ne.s32.totalorder %s357, %s373
    %p375 = scmp.eq.s32.totalorder %s29, 0
    %p376 = por %p374, %p375
    %p377 = scmp.le.s32.totalorder 1, %s23
    %p378 = scmp.lt.s32.totalorder %s23, 3
    %p379 = pnand %p377, %p378
    %p380 = pneg %p379
    // Predicated region
    $region9: #{discriminator_forward.1} parent=5 // pred_check
      _
    $region10: #{discriminator_forward.1} parent=5 // pred_check_branch
      %382 = sbr.rel (%p379) target = $region12
    $region11: #{discriminator_forward.1} parent=5 // pred_region
      %s383 = ssub.s32 %s23, 1
      // Predicated region
      $region13: #{discriminator_forward.1} parent=11 // pred_check
        %p384 = pneg %p70
      $region14: #{discriminator_forward.1} parent=11 // pred_check_branch
        %386 = sbr.rel (%p384) target = $region16
      $region15: #{discriminator_forward.1} parent=11 // pred_region
        _
      $region16: #{discriminator_forward.1} parent=11 // pred_fallthru
        _
      // Predicated region
      $region17: #{discriminator_forward.1} parent=11 // pred_check
        %p387 = pneg %p91
      $region18: #{discriminator_forward.1} parent=11 // pred_check_branch
        %389 = sbr.rel (%p387) target = $region20
      $region19: #{discriminator_forward.1} parent=11 // pred_region
        _
      $region20: #{discriminator_forward.1} parent=11 // pred_fallthru
        _
      // Predicated region
      $region21: #{discriminator_forward.1} parent=11 // pred_check
        %p390 = pneg %p112
      $region22: #{discriminator_forward.1} parent=11 // pred_check_branch
        %392 = sbr.rel (%p390) target = $region24
      $region23: #{discriminator_forward.1} parent=11 // pred_region
        _
      $region24: #{discriminator_forward.1} parent=11 // pred_fallthru
        _
      // Predicated region
      $region25: #{discriminator_forward.1} parent=11 // pred_check
        %p393 = pneg %p133
      $region26: #{discriminator_forward.1} parent=11 // pred_check_branch
        %395 = sbr.rel (%p393) target = $region28
      $region27: #{discriminator_forward.1} parent=11 // pred_region
        _
      $region28: #{discriminator_forward.1} parent=11 // pred_fallthru
        _
      // Predicated region
      $region29: #{discriminator_forward.1} parent=11 // pred_check
        %p396 = pneg %p154
      $region30: #{discriminator_forward.1} parent=11 // pred_check_branch
        %398 = sbr.rel (%p396) target = $region32
      $region31: #{discriminator_forward.1} parent=11 // pred_region
        _
      $region32: #{discriminator_forward.1} parent=11 // pred_fallthru
        _
      // Predicated region
      $region33: #{discriminator_forward.1} parent=11 // pred_check
        %p399 = pneg %p175
      $region34: #{discriminator_forward.1} parent=11 // pred_check_branch
        %401 = sbr.rel (%p399) target = $region36
      $region35: #{discriminator_forward.1} parent=11 // pred_region
        _
      $region36: #{discriminator_forward.1} parent=11 // pred_fallthru
        _
      // Predicated region
      $region37: #{discriminator_forward.1} parent=11 // pred_check
        %p402 = pneg %p196
      $region38: #{discriminator_forward.1} parent=11 // pred_check_branch
        %404 = sbr.rel (%p402) target = $region40
      $region39: #{discriminator_forward.1} parent=11 // pred_region
        _
      $region40: #{discriminator_forward.1} parent=11 // pred_fallthru
        _
      // Predicated region
      $region41: #{discriminator_forward.1} parent=11 // pred_check
        %p405 = pneg %p217
      $region42: #{discriminator_forward.1} parent=11 // pred_check_branch
        %407 = sbr.rel (%p405) target = $region44
      $region43: #{discriminator_forward.1} parent=11 // pred_region
        _
      $region44: #{discriminator_forward.1} parent=11 // pred_fallthru
        _
      // Predicated region
      $region45: #{discriminator_forward.1} parent=11 // pred_check
        %p408 = pneg %p238
      $region46: #{discriminator_forward.1} parent=11 // pred_check_branch
        %410 = sbr.rel (%p408) target = $region48
      $region47: #{discriminator_forward.1} parent=11 // pred_region
        _
      $region48: #{discriminator_forward.1} parent=11 // pred_fallthru
        _
      // Predicated region
      $region49: #{discriminator_forward.1} parent=11 // pred_check
        %p411 = pneg %p259
      $region50: #{discriminator_forward.1} parent=11 // pred_check_branch
        %413 = sbr.rel (%p411) target = $region52
      $region51: #{discriminator_forward.1} parent=11 // pred_region
        _
      $region52: #{discriminator_forward.1} parent=11 // pred_fallthru
        _
      // Predicated region
      $region53: #{discriminator_forward.1} parent=11 // pred_check
        %p414 = pneg %p280
      $region54: #{discriminator_forward.1} parent=11 // pred_check_branch
        %416 = sbr.rel (%p414) target = $region56
      $region55: #{discriminator_forward.1} parent=11 // pred_region
        _
      $region56: #{discriminator_forward.1} parent=11 // pred_fallthru
        _
      // Predicated region
      $region57: #{discriminator_forward.1} parent=11 // pred_check
        %p417 = pneg %p301
      $region58: #{discriminator_forward.1} parent=11 // pred_check_branch
        %419 = sbr.rel (%p417) target = $region60
      $region59: #{discriminator_forward.1} parent=11 // pred_region
        _
      $region60: #{discriminator_forward.1} parent=11 // pred_fallthru
        _
      // Predicated region
      $region61: #{discriminator_forward.1} parent=11 // pred_check
        %p420 = pneg %p322
      $region62: #{discriminator_forward.1} parent=11 // pred_check_branch
        %422 = sbr.rel (%p420) target = $region64
      $region63: #{discriminator_forward.1} parent=11 // pred_region
        _
      $region64: #{discriminator_forward.1} parent=11 // pred_fallthru
        _
      // Predicated region
      $region65: #{discriminator_forward.1} parent=11 // pred_check
        %p423 = pneg %p343
      $region66: #{discriminator_forward.1} parent=11 // pred_check_branch
        %425 = sbr.rel (%p423) target = $region68
      $region67: #{discriminator_forward.1} parent=11 // pred_region
        _
      $region68: #{discriminator_forward.1} parent=11 // pred_fallthru
        _
    $region12: #{discriminator_forward.1} parent=5 // pred_fallthru
      _
    %p426 = scmp.lt.s32.totalorder %s23, 2
    // Predicated region
    $region69: #{discriminator_forward.1} parent=5 // pred_check
      %p427 = pneg %p426
    $region70: #{discriminator_forward.1} parent=5 // pred_check_branch
      %429 = sbr.rel (%p427) target = $region72
    $region71: #{discriminator_forward.1} parent=5 // pred_region
      // Predicated region
      $region73: #{discriminator_forward.1} parent=71 // pred_check
        %p430 = pneg %p43
      $region74: #{discriminator_forward.1} parent=71 // pred_check_branch
        %432 = sbr.rel (%p430) target = $region76
      $region75: #{discriminator_forward.1} parent=71 // pred_region
        %s433 = smul.u32 8, %s23
        %p434 = scmp.lt.s32.totalorder %s433, 15
        %s435 = scalar_select %p434, %s433, 15
        %s436 = smul.addr %s435, 8
        %s437 = scalar_lea.vmem %s0, %s436
        %s438 = smul.u32 8, %s23
      $region76: #{discriminator_forward.1} parent=71 // pred_fallthru
        _
    $region72: #{discriminator_forward.1} parent=5 // pred_fallthru
      _
    %p439 = scmp.le.s32.totalorder 1, %s23
    %p440 = scmp.lt.s32.totalorder %s23, 3
    %p441 = pnand %p439, %p440
    %p442 = pneg %p441
    // Predicated region
    $region77: #{discriminator_forward.1} parent=5 // pred_check
      _
    $region78: #{discriminator_forward.1} parent=5 // pred_check_branch
      %444 = sbr.rel (%p441) target = $region80
    $region79: #{discriminator_forward.1} parent=5 // pred_region
      %s445 = ssub.s32 %s23, 1
      %s446 = smul.u32 8, %s28
      %p447 = scmp.lt.s32.totalorder %s446, 15
      %s448 = scalar_select %p447, %s446, 15
      %s449 = smul.addr %s448, 8
      %s450 = scalar_lea.vmem %s0, %s449
      %p451 = pneg %p49
      %p452 = pneg %p46
      %p453 = pneg %p70
      %p454 = pneg %p67
      %p455 = pneg %p91
      %p456 = pneg %p88
      %p457 = pneg %p112
      %p458 = pneg %p109
      %p459 = pneg %p133
      %p460 = pneg %p130
      %p461 = pneg %p154
      %p462 = pneg %p151
      %p463 = pneg %p175
      %p464 = pneg %p172
      %p465 = pneg %p196
      %p466 = pneg %p193
      %p467 = pneg %p217
      %p468 = pneg %p214
      %p469 = pneg %p238
      %p470 = pneg %p235
      %p471 = pneg %p259
      %p472 = pneg %p256
      %p473 = pneg %p280
      %p474 = pneg %p277
      %p475 = pneg %p301
      %p476 = pneg %p298
      %p477 = pneg %p322
      %p478 = pneg %p319
      %p479 = pneg %p343
      %p480 = pneg %p340
      %p481 = pneg %p369
      %p482 = pneg %p366
      %p483 = scmp.lt.s32.totalorder %s28, 1
      %s484 = scalar_select %p483, %s28, 1
      %s485 = smul.addr %s484, 8
      %s486 = scalar_lea.vmem %s15, %s485
      %s487 = smul.u32 8, %s28
      %p488 = scmp.lt.s32.totalorder %s487, 15
      %s489 = scalar_select %p488, %s487, 15
      %s490 = smul.addr %s489, 8
      %s491 = scalar_lea.vmem %s0, %s490
      %s492 = smul.u32 8, %s28
      %p493 = scmp.lt.s32.totalorder %s28, 1
      %s494 = scalar_select %p493, %s28, 1
      %s495 = smul.addr %s494, 8
      %s496 = scalar_lea.vmem %s15, %s495
      %v498 = vlaneseq
      %v499 = vshrl.u32 %v498, 7
      %v500 = vadd.s32 %v499, 8
      %v501 = vadd.s32 %v499, 16
      %v502 = vadd.s32 %v499, 24
      %v503 = vadd.s32 %v499, 32
      %v504 = vadd.s32 %v499, 40
      %v505 = vadd.s32 %v499, 48
      %v506 = vadd.s32 %v499, 56
      %vm507 = vcmp.lt.s32.totalorder %v499, 0
      %v508 = vsub.s32 0, %v499
      %v509 = vsel %vm507, %v508, %v499
      %v510 = vshrl.u32 %v509, 3
      %v511 = vand.u32 %v509, 7
      %v512 = vsub.s32 0, %v511
      %v513 = vsel %vm507, %v512, %v511
      %vm514 = vcmp.lt.s32.totalorder %v500, 0
      %v515 = vsub.s32 0, %v500
      %v516 = vsel %vm514, %v515, %v500
      %v517 = vshrl.u32 %v516, 3
      %v518 = vand.u32 %v516, 7
      %v519 = vsub.s32 0, %v518
      %v520 = vsel %vm514, %v519, %v518
      %vm521 = vcmp.lt.s32.totalorder %v501, 0
      %v522 = vsub.s32 0, %v501
      %v523 = vsel %vm521, %v522, %v501
      %v524 = vshrl.u32 %v523, 3
      %v525 = vand.u32 %v523, 7
      %v526 = vsub.s32 0, %v525
      %v527 = vsel %vm521, %v526, %v525
      %vm528 = vcmp.lt.s32.totalorder %v502, 0
      %v529 = vsub.s32 0, %v502
      %v530 = vsel %vm528, %v529, %v502
      %v531 = vshrl.u32 %v530, 3
      %v532 = vand.u32 %v530, 7
      %v533 = vsub.s32 0, %v532
      %v534 = vsel %vm528, %v533, %v532
      %vm535 = vcmp.lt.s32.totalorder %v503, 0
      %v536 = vsub.s32 0, %v503
      %v537 = vsel %vm535, %v536, %v503
      %v538 = vshrl.u32 %v537, 3
      %v539 = vand.u32 %v537, 7
      %v540 = vsub.s32 0, %v539
      %v541 = vsel %vm535, %v540, %v539
      %vm542 = vcmp.lt.s32.totalorder %v504, 0
      %v543 = vsub.s32 0, %v504
      %v544 = vsel %vm542, %v543, %v504
      %v545 = vshrl.u32 %v544, 3
      %v546 = vand.u32 %v544, 7
      %v547 = vsub.s32 0, %v546
      %v548 = vsel %vm542, %v547, %v546
      %vm549 = vcmp.lt.s32.totalorder %v505, 0
      %v550 = vsub.s32 0, %v505
      %v551 = vsel %vm549, %v550, %v505
      %v552 = vshrl.u32 %v551, 3
      %v553 = vand.u32 %v551, 7
      %v554 = vsub.s32 0, %v553
      %v555 = vsel %vm549, %v554, %v553
      %vm556 = vcmp.lt.s32.totalorder %v506, 0
      %v557 = vsub.s32 0, %v506
      %v558 = vsel %vm556, %v557, %v506
      %v559 = vshrl.u32 %v558, 3
      %v560 = vand.u32 %v558, 7
      %v561 = vsub.s32 0, %v560
      %v562 = vsel %vm556, %v561, %v560
      %vm563 = vcmp.ne.s32.totalorder %v513, 0
      %vm564 = vcmp.ne.s32.totalorder %v520, 0
      %vm565 = vcmp.ne.s32.totalorder %v527, 0
      %vm566 = vcmp.ne.s32.totalorder %v534, 0
      %vm567 = vcmp.ne.s32.totalorder %v541, 0
      %vm568 = vcmp.ne.s32.totalorder %v548, 0
      %vm569 = vcmp.ne.s32.totalorder %v555, 0
      %vm570 = vcmp.ne.s32.totalorder %v562, 0
      %vm571 = vcmp.lt.s32.totalorder %v513, 0
      %vm572 = vcmp.lt.s32.totalorder %v520, 0
      %vm573 = vcmp.lt.s32.totalorder %v527, 0
      %vm574 = vcmp.lt.s32.totalorder %v534, 0
      %vm575 = vcmp.lt.s32.totalorder %v541, 0
      %vm576 = vcmp.lt.s32.totalorder %v548, 0
      %vm577 = vcmp.lt.s32.totalorder %v555, 0
      %vm578 = vcmp.lt.s32.totalorder %v562, 0
      %vm579 = vmand %vm571, %vm563
      %vm580 = vmand %vm572, %vm564
      %vm581 = vmand %vm573, %vm565
      %vm582 = vmand %vm574, %vm566
      %vm583 = vmand %vm575, %vm567
      %vm584 = vmand %vm576, %vm568
      %vm585 = vmand %vm577, %vm569
      %vm586 = vmand %vm578, %vm570
      %v587 = vadd.s32 %v513, 8
      %v588 = vadd.s32 %v520, 8
      %v589 = vadd.s32 %v527, 8
      %v590 = vadd.s32 %v534, 8
      %v591 = vadd.s32 %v541, 8
      %v592 = vadd.s32 %v548, 8
      %v593 = vadd.s32 %v555, 8
      %v594 = vadd.s32 %v562, 8
      %v595 = vsel %vm579, %v587, %v513
      %v596 = vsel %vm580, %v588, %v520
      %v597 = vsel %vm581, %v589, %v527
      %v598 = vsel %vm582, %v590, %v534
      %v599 = vsel %vm583, %v591, %v541
      %v600 = vsel %vm584, %v592, %v548
      %v601 = vsel %vm585, %v593, %v555
      %v602 = vsel %vm586, %v594, %v562
      %vm603 = vcmp.ne.s32.totalorder %v595, 0
      %vm604 = vcmp.ne.s32.totalorder %v596, 0
      %vm605 = vcmp.ne.s32.totalorder %v597, 0
      %vm606 = vcmp.ne.s32.totalorder %v598, 0
      %vm607 = vcmp.ne.s32.totalorder %v599, 0
      %vm608 = vcmp.ne.s32.totalorder %v600, 0
      %vm609 = vcmp.ne.s32.totalorder %v601, 0
      %vm610 = vcmp.ne.s32.totalorder %v602, 0
      %vm611 = vcmp.ne.s32.totalorder %v595, 7
      %vm612 = vcmp.ne.s32.totalorder %v596, 7
      %vm613 = vcmp.ne.s32.totalorder %v597, 7
      %vm614 = vcmp.ne.s32.totalorder %v598, 7
      %vm615 = vcmp.ne.s32.totalorder %v599, 7
      %vm616 = vcmp.ne.s32.totalorder %v600, 7
      %vm617 = vcmp.ne.s32.totalorder %v601, 7
      %vm618 = vcmp.ne.s32.totalorder %v602, 7
      %v619 = vld [vmem:[%s491] sm:$0xff]
      %v620 = vld [vmem:[%s491 + $0x8] sm:$0xff]
      %v621 = vld [vmem:[%s491 + $0x10] sm:$0xff]
      %v622 = vld [vmem:[%s491 + $0x18] sm:$0xff]
      %v623 = vld [vmem:[%s491 + $0x20] sm:$0xff]
      %v624 = vld [vmem:[%s491 + $0x28] sm:$0xff]
      %v625 = vld [vmem:[%s491 + $0x30] sm:$0xff]
      %v626 = vld [vmem:[%s491 + $0x38] sm:$0xff]
      %v627 = vrot.slane %v619, 7
      %v628 = vrot.slane %v620, 7
      %v629 = vrot.slane %v621, 7
      %v630 = vrot.slane %v622, 7
      %v631 = vrot.slane %v623, 7
      %v632 = vrot.slane %v624, 7
      %v633 = vrot.slane %v625, 7
      %v634 = vrot.slane %v626, 7
      %vm635 = vcmp.lt.s32.totalorder %v499, 1
      %v636 = vsel %vm635, %v633, %v634
      %v637 = vsel %vm635, %v632, %v633
      %v638 = vsel %vm635, %v631, %v632
      %v639 = vsel %vm635, %v630, %v631
      %v640 = vsel %vm635, %v629, %v630
      %v641 = vsel %vm635, %v628, %v629
      %v642 = vsel %vm635, %v627, %v628
      %v643 = vsel %vm635, %v634, %v627
      %v644 = vsel %vm603, 1, 0
      %v645 = vsel %vm604, 1, 0
      %v646 = vsel %vm605, 1, 0
      %v647 = vsel %vm606, 1, 0
      %v648 = vsel %vm607, 1, 0
      %v649 = vsel %vm608, 1, 0
      %v650 = vsel %vm609, 1, 0
      %v651 = vsel %vm610, 1, 0
      %vm652 = vcmp.eq.s32.totalorder %v644, 1
      %vm653 = vcmp.eq.s32.totalorder %v645, 1
      %vm654 = vcmp.eq.s32.totalorder %v646, 1
      %vm655 = vcmp.eq.s32.totalorder %v647, 1
      %vm656 = vcmp.eq.s32.totalorder %v648, 1
      %vm657 = vcmp.eq.s32.totalorder %v649, 1
      %vm658 = vcmp.eq.s32.totalorder %v650, 1
      %vm659 = vcmp.eq.s32.totalorder %v651, 1
      %v660 = vsel %vm652, %v643, 0.0
      %v661 = vsel %vm653, %v642, 0.0
      %v662 = vsel %vm654, %v641, 0.0
      %v663 = vsel %vm655, %v640, 0.0
      %v664 = vsel %vm656, %v639, 0.0
      %v665 = vsel %vm657, %v638, 0.0
      %v666 = vsel %vm658, %v637, 0.0
      %v667 = vsel %vm659, %v636, 0.0
      %v668 = vrot.slane %v619, 1
      %v669 = vrot.slane %v620, 1
      %v670 = vrot.slane %v621, 1
      %v671 = vrot.slane %v622, 1
      %v672 = vrot.slane %v623, 1
      %v673 = vrot.slane %v624, 1
      %v674 = vrot.slane %v625, 1
      %v675 = vrot.slane %v626, 1
      %vm676 = vcmp.lt.s32.totalorder %v499, 7
      %v677 = vsel %vm676, %v674, %v675
      %v678 = vsel %vm676, %v673, %v674
      %v679 = vsel %vm676, %v672, %v673
      %v680 = vsel %vm676, %v671, %v672
      %v681 = vsel %vm676, %v670, %v671
      %v682 = vsel %vm676, %v669, %v670
      %v683 = vsel %vm676, %v668, %v669
      %v684 = vsel %vm676, %v675, %v668
      %v685 = vsel %vm611, 1, 0
      %v686 = vsel %vm612, 1, 0
      %v687 = vsel %vm613, 1, 0
      %v688 = vsel %vm614, 1, 0
      %v689 = vsel %vm615, 1, 0
      %v690 = vsel %vm616, 1, 0
      %v691 = vsel %vm617, 1, 0
      %v692 = vsel %vm618, 1, 0
      %vm693 = vcmp.eq.s32.totalorder %v685, 1
      %vm694 = vcmp.eq.s32.totalorder %v686, 1
      %vm695 = vcmp.eq.s32.totalorder %v687, 1
      %vm696 = vcmp.eq.s32.totalorder %v688, 1
      %vm697 = vcmp.eq.s32.totalorder %v689, 1
      %vm698 = vcmp.eq.s32.totalorder %v690, 1
      %vm699 = vcmp.eq.s32.totalorder %v691, 1
      %vm700 = vcmp.eq.s32.totalorder %v692, 1
      %v701 = vsel %vm693, %v683, 0.0
      %v702 = vsel %vm694, %v682, 0.0
      %v703 = vsel %vm695, %v681, 0.0
      %v704 = vsel %vm696, %v680, 0.0
      %v705 = vsel %vm697, %v679, 0.0
      %v706 = vsel %vm698, %v678, 0.0
      %v707 = vsel %vm699, %v677, 0.0
      %v708 = vsel %vm700, %v684, 0.0
      %717 = vrot.lane.b32.xlu0 %v619, 4
      %v718 = vpop.permute.xlu0 %717
      %719 = vrot.lane.b32.xlu0 %v620, 4
      %v720 = vpop.permute.xlu0 %719
      %721 = vrot.lane.b32.xlu0 %v621, 4
      %v722 = vpop.permute.xlu0 %721
      %723 = vrot.lane.b32.xlu0 %v622, 4
      %v724 = vpop.permute.xlu0 %723
      %725 = vrot.lane.b32.xlu0 %v623, 4
      %v726 = vpop.permute.xlu0 %725
      %727 = vrot.lane.b32.xlu0 %v624, 4
      %v728 = vpop.permute.xlu0 %727
      %729 = vrot.lane.b32.xlu0 %v625, 4
      %v730 = vpop.permute.xlu0 %729
      %731 = vrot.lane.b32.xlu0 %v626, 4
      %v732 = vpop.permute.xlu0 %731
      %749 = vrot.lane.b32.xlu0 %v701, 8
      %v750 = vpop.permute.xlu0 %749
      %751 = vrot.lane.b32.xlu0 %v702, 8
      %v752 = vpop.permute.xlu0 %751
      %753 = vrot.lane.b32.xlu0 %v703, 8
      %v754 = vpop.permute.xlu0 %753
      %755 = vrot.lane.b32.xlu0 %v704, 8
      %v756 = vpop.permute.xlu0 %755
      %757 = vrot.lane.b32.xlu0 %v705, 8
      %v758 = vpop.permute.xlu0 %757
      %759 = vrot.lane.b32.xlu0 %v706, 8
      %v760 = vpop.permute.xlu0 %759
      %761 = vrot.lane.b32.xlu0 %v707, 8
      %v762 = vpop.permute.xlu0 %761
      %763 = vrot.lane.b32.xlu0 %v708, 8
      %v764 = vpop.permute.xlu0 %763
      %vm773 = vcmask 31744
      %v774 = vsel %vm773, %v660, %v718
      %v775 = vsel %vm773, %v661, %v720
      %v776 = vsel %vm773, %v662, %v722
      %v777 = vsel %vm773, %v663, %v724
      %v778 = vsel %vm773, %v664, %v726
      %v779 = vsel %vm773, %v665, %v728
      %v780 = vsel %vm773, %v666, %v730
      %v781 = vsel %vm773, %v667, %v732
      %vm782 = vcmask 64512
      %v783 = vsel %vm782, %v774, %v750
      %v784 = vsel %vm782, %v775, %v752
      %v785 = vsel %vm782, %v776, %v754
      %v786 = vsel %vm782, %v777, %v756
      %v787 = vsel %vm782, %v778, %v758
      %v788 = vsel %vm782, %v779, %v760
      %v789 = vsel %vm782, %v780, %v762
      %v790 = vsel %vm782, %v781, %v764
      %v791 = vpack.c.bf16 %v784, %v783
      %v792 = vpack.c.bf16 %v786, %v785
      %v793 = vpack.c.bf16 %v788, %v787
      %v794 = vpack.c.bf16 %v790, %v789
      %v795 = vld [vmem:[%s1] sm:$0xf]
      %v796 = vld [vmem:[%s1 + $0x4] sm:$0x3]
      %v797 = vld [vmem:[%s2] sm:$0x1]
      %v799 = vlaneseq
      %v800 = vshrl.u32 %v799, 7
      %v801 = vsub.s32 0, %v800
      %v802 = vrot.slane %v797, %v801
      %v806 = vunpack.c.l.b16 %v795
      %v807 = vunpack.c.l.b16 %v796
      %v808 = vpack.c.b16 %v807, %v806
      %vm809 = vcmask 97280
      %v811 = vsel %vm809, %v791, 0
      %v814 = vsel %vm809, %v792, 0
      %v817 = vsel %vm809, %v793, 0
      %v820 = vsel %vm809, %v794, 0
      %vm822 = vcmask 1045504
      %v824 = vsel %vm822, %v808, 0
      %826 = vmatprep.subr.bf16.mxu0 0
      %827 = vmatpush1.bf16.msra.mxu0 0
      %828 = vmatprep.subr.bf16.mxu0 0
      %829 = vmatpush1.bf16.msra.mxu0 0
      %830 = vmatprep.subr.bf16.mxu0 0
      %831 = vmatpush1.bf16.msra.mxu0 0
      %832 = vmatprep.subr.bf16.mxu0 0
      %833 = vmatpush1.bf16.msra.mxu0 0
      %834 = vmatprep.subr.bf16.mxu0 0
      %835 = vmatpush1.bf16.msra.mxu0 0
      %836 = vmatprep.subr.bf16.mxu0 0
      %837 = vmatpush1.bf16.msra.mxu0 0
      %838 = vmatprep.subr.bf16.mxu0 0
      %839 = vmatpush1.bf16.msra.mxu0 0
      %840 = vmatprep.subr.bf16.mxu0 0
      %841 = vmatpush1.bf16.msra.mxu0 %v824
      %842 = vmatprep.subr.bf16.mxu0 0
      %843 = vmatpush2.bf16.msra.mxu0 0
      %844 = vmatprep.subr.bf16.mxu0 0
      %845 = vmatpush2.bf16.msra.mxu0 0
      %846 = vmatprep.subr.bf16.mxu0 0
      %847 = vmatpush2.bf16.msra.mxu0 0
      %848 = vmatprep.subr.bf16.mxu0 0
      %849 = vmatpush2.bf16.msra.mxu0 0
      %850 = vmatprep.subr.bf16.mxu0 0
      %851 = vmatpush2.bf16.msra.mxu0 0
      %852 = vmatprep.subr.bf16.mxu0 0
      %853 = vmatpush2.bf16.msra.mxu0 0
      %854 = vmatprep.subr.bf16.mxu0 0
      %855 = vmatpush2.bf16.msra.mxu0 0
      %856 = vmatprep.subr.bf16.mxu0 0
      %857 = vmatpush2.bf16.msra.mxu0 0
      %858 = vmatprep.mubr.bf16.mxu0 0
      %859 = vmatmul.mubr.bf16.gmra.mxu0 %v811
      %v860 = vpop.f32.mrf.mxu0
      %v861 = vadd.f32 %v802, %v860
      %v862 = vpop.f32.mrf.mxu0
      %v863 = vpop.f32.mrf.mxu0
      %v864 = vadd.f32 %v802, %v863
      %v865 = vpop.f32.mrf.mxu0
      %866 = vmatprep.mubr.bf16.mxu0 0
      %867 = vmatmul.mubr.bf16.gmra.mxu0 %v814
      %v868 = vpop.f32.mrf.mxu0
      %v869 = vadd.f32 %v802, %v868
      %v870 = vpop.f32.mrf.mxu0
      %v871 = vpop.f32.mrf.mxu0
      %v872 = vadd.f32 %v802, %v871
      %v873 = vpop.f32.mrf.mxu0
      %874 = vmatprep.mubr.bf16.mxu0 0
      %875 = vmatmul.mubr.bf16.gmra.mxu0 %v817
      %v876 = vpop.f32.mrf.mxu0
      %v877 = vadd.f32 %v802, %v876
      %v878 = vpop.f32.mrf.mxu0
      %v879 = vpop.f32.mrf.mxu0
      %v880 = vadd.f32 %v802, %v879
      %v881 = vpop.f32.mrf.mxu0
      %882 = vmatprep.mubr.bf16.mxu0 0
      %883 = vmatmul.mubr.bf16.gmra.mxu0 %v820
      %v884 = vpop.f32.mrf.mxu0
      %v885 = vadd.f32 %v802, %v884
      %v886 = vpop.f32.mrf.mxu0
      %v887 = vpop.f32.mrf.mxu0
      %v888 = vadd.f32 %v802, %v887
      %v889 = vpop.f32.mrf.mxu0
      %890 = vdwg.mxu0
      %vm891 = vcmp.gt.f32.partialorder %v861, 0.0
      %vm892 = vcmp.gt.f32.partialorder %v864, 0.0
      %vm893 = vcmp.gt.f32.partialorder %v869, 0.0
      %vm894 = vcmp.gt.f32.partialorder %v872, 0.0
      %vm895 = vcmp.gt.f32.partialorder %v877, 0.0
      %vm896 = vcmp.gt.f32.partialorder %v880, 0.0
      %vm897 = vcmp.gt.f32.partialorder %v885, 0.0
      %vm898 = vcmp.gt.f32.partialorder %v888, 0.0
      %v899 = vmul.f32 %v861, 0.2
      %v900 = vmul.f32 %v864, 0.2
      %v901 = vmul.f32 %v869, 0.2
      %v902 = vmul.f32 %v872, 0.2
      %v903 = vmul.f32 %v877, 0.2
      %v904 = vmul.f32 %v880, 0.2
      %v905 = vmul.f32 %v885, 0.2
      %v906 = vmul.f32 %v888, 0.2
      %v907 = vsel %vm891, %v861, %v899
      %v908 = vsel %vm892, %v864, %v900
      %v909 = vsel %vm893, %v869, %v901
      %v910 = vsel %vm894, %v872, %v902
      %v911 = vsel %vm895, %v877, %v903
      %v912 = vsel %vm896, %v880, %v904
      %v913 = vsel %vm897, %v885, %v905
      %v914 = vsel %vm898, %v888, %v906
      %v915 = vrot.slane %v907, 7
      %v916 = vrot.slane %v908, 7
      %v917 = vrot.slane %v909, 7
      %v918 = vrot.slane %v910, 7
      %v919 = vrot.slane %v911, 7
      %v920 = vrot.slane %v912, 7
      %v921 = vrot.slane %v913, 7
      %v922 = vrot.slane %v914, 7
      %v923 = vsel %vm635, %v921, %v922
      %v924 = vsel %vm635, %v920, %v921
      %v925 = vsel %vm635, %v919, %v920
      %v926 = vsel %vm635, %v918, %v919
      %v927 = vsel %vm635, %v917, %v918
      %v928 = vsel %vm635, %v916, %v917
      %v929 = vsel %vm635, %v915, %v916
      %v930 = vsel %vm635, %v922, %v915
      %v931 = vsel %vm652, %v930, 0.0
      %v932 = vsel %vm653, %v929, 0.0
      %v933 = vsel %vm654, %v928, 0.0
      %v934 = vsel %vm655, %v927, 0.0
      %v935 = vsel %vm656, %v926, 0.0
      %v936 = vsel %vm657, %v925, 0.0
      %v937 = vsel %vm658, %v924, 0.0
      %v938 = vsel %vm659, %v923, 0.0
      %v939 = vrot.slane %v907, 1
      %v940 = vrot.slane %v908, 1
      %v941 = vrot.slane %v909, 1
      %v942 = vrot.slane %v910, 1
      %v943 = vrot.slane %v911, 1
      %v944 = vrot.slane %v912, 1
      %v945 = vrot.slane %v913, 1
      %v946 = vrot.slane %v914, 1
      %v947 = vsel %vm676, %v945, %v946
      %v948 = vsel %vm676, %v944, %v945
      %v949 = vsel %vm676, %v943, %v944
      %v950 = vsel %vm676, %v942, %v943
      %v951 = vsel %vm676, %v941, %v942
      %v952 = vsel %vm676, %v940, %v941
      %v953 = vsel %vm676, %v939, %v940
      %v954 = vsel %vm676, %v946, %v939
      %v955 = vsel %vm693, %v953, 0.0
      %v956 = vsel %vm694, %v952, 0.0
      %v957 = vsel %vm695, %v951, 0.0
      %v958 = vsel %vm696, %v950, 0.0
      %v959 = vsel %vm697, %v949, 0.0
      %v960 = vsel %vm698, %v948, 0.0
      %v961 = vsel %vm699, %v947, 0.0
      %v962 = vsel %vm700, %v954, 0.0
      %971 = vrot.lane.b32.xlu0 %v907, 32
      %v972 = vpop.permute.xlu0 %971
      %973 = vrot.lane.b32.xlu0 %v908, 32
      %v974 = vpop.permute.xlu0 %973
      %975 = vrot.lane.b32.xlu0 %v909, 32
      %v976 = vpop.permute.xlu0 %975
      %977 = vrot.lane.b32.xlu0 %v910, 32
      %v978 = vpop.permute.xlu0 %977
      %979 = vrot.lane.b32.xlu0 %v911, 32
      %v980 = vpop.permute.xlu0 %979
      %981 = vrot.lane.b32.xlu0 %v912, 32
      %v982 = vpop.permute.xlu0 %981
      %983 = vrot.lane.b32.xlu0 %v913, 32
      %v984 = vpop.permute.xlu0 %983
      %985 = vrot.lane.b32.xlu0 %v914, 32
      %v986 = vpop.permute.xlu0 %985
      %1003 = vrot.lane.b32.xlu0 %v955, 64
      %v1004 = vpop.permute.xlu0 %1003
      %1005 = vrot.lane.b32.xlu0 %v956, 64
      %v1006 = vpop.permute.xlu0 %1005
      %1007 = vrot.lane.b32.xlu0 %v957, 64
      %v1008 = vpop.permute.xlu0 %1007
      %1009 = vrot.lane.b32.xlu0 %v958, 64
      %v1010 = vpop.permute.xlu0 %1009
      %1011 = vrot.lane.b32.xlu0 %v959, 64
      %v1012 = vpop.permute.xlu0 %1011
      %1013 = vrot.lane.b32.xlu0 %v960, 64
      %v1014 = vpop.permute.xlu0 %1013
      %1015 = vrot.lane.b32.xlu0 %v961, 64
      %v1016 = vpop.permute.xlu0 %1015
      %1017 = vrot.lane.b32.xlu0 %v962, 64
      %v1018 = vpop.permute.xlu0 %1017
      %vm1027 = vcmask 261120
      %v1028 = vsel %vm1027, %v931, %v972
      %v1029 = vsel %vm1027, %v932, %v974
      %v1030 = vsel %vm1027, %v933, %v976
      %v1031 = vsel %vm1027, %v934, %v978
      %v1032 = vsel %vm1027, %v935, %v980
      %v1033 = vsel %vm1027, %v936, %v982
      %v1034 = vsel %vm1027, %v937, %v984
      %v1035 = vsel %vm1027, %v938, %v986
      %vm1036 = vcmask 523264
      %v1037 = vsel %vm1036, %v1028, %v1004
      %v1038 = vsel %vm1036, %v1029, %v1006
      %v1039 = vsel %vm1036, %v1030, %v1008
      %v1040 = vsel %vm1036, %v1031, %v1010
      %v1041 = vsel %vm1036, %v1032, %v1012
      %v1042 = vsel %vm1036, %v1033, %v1014
      %v1043 = vsel %vm1036, %v1034, %v1016
      %v1044 = vsel %vm1036, %v1035, %v1018
      %v1045 = vpack.c.bf16 %v1038, %v1037
      %v1046 = vpack.c.bf16 %v1040, %v1039
      %v1047 = vpack.c.bf16 %v1042, %v1041
      %v1048 = vpack.c.bf16 %v1044, %v1043
      %v1049 = vld [vmem:[%s3] sm:$0xf]
      %v1050 = vld [vmem:[%s3 + $0x4] sm:$0xf]
      %v1051 = vld [vmem:[%s3 + $0x8] sm:$0xf]
      %v1052 = vld [vmem:[%s3 + $0xc] sm:$0xf]
      %v1053 = vld [vmem:[%s3 + $0x10] sm:$0xf]
      %v1054 = vld [vmem:[%s3 + $0x14] sm:$0xf]
      %v1055 = vld [vmem:[%s3 + $0x18] sm:$0xf]
      %v1056 = vld [vmem:[%s3 + $0x1c] sm:$0xf]
      %v1057 = vld [vmem:[%s3 + $0x20] sm:$0xf]
      %v1058 = vld [vmem:[%s3 + $0x24] sm:$0xf]
      %v1059 = vld [vmem:[%s3 + $0x28] sm:$0xf]
      %v1060 = vld [vmem:[%s3 + $0x2c] sm:$0xf]
      %v1061 = vld [vmem:[%s4] sm:$0x1]
      %v1063 = vlaneseq
      %v1064 = vshrl.u32 %v1063, 7
      %v1065 = vsub.s32 0, %v1064
      %v1066 = vrot.slane %v1061, %v1065
      %v1080 = vunpack.c.l.b16 %v1049
      %v1081 = vunpack.c.l.b16 %v1050
      %v1082 = vunpack.c.l.b16 %v1051
      %v1083 = vunpack.c.l.b16 %v1052
      %v1084 = vunpack.c.l.b16 %v1053
      %v1085 = vunpack.c.l.b16 %v1054
      %v1086 = vunpack.c.l.b16 %v1055
      %v1087 = vunpack.c.l.b16 %v1056
      %v1088 = vunpack.c.l.b16 %v1057
      %v1089 = vunpack.c.l.b16 %v1058
      %v1090 = vunpack.c.l.b16 %v1059
      %v1091 = vunpack.c.l.b16 %v1060
      %v1092 = vpack.c.b16 %v1081, %v1080
      %v1093 = vpack.c.b16 %v1083, %v1082
      %v1094 = vpack.c.b16 %v1085, %v1084
      %v1095 = vpack.c.b16 %v1087, %v1086
      %v1096 = vpack.c.b16 %v1089, %v1088
      %v1097 = vpack.c.b16 %v1091, %v1090
      %vm1104 = vcmask 785408
      %v1106 = vsel %vm1104, %v1045, 0
      %v1109 = vsel %vm1104, %v1046, 0
      %v1112 = vsel %vm1104, %v1047, 0
      %v1115 = vsel %vm1104, %v1048, 0
      %1117 = vmatprep.subr.bf16.mxu0 0
      %1118 = vmatpush1.bf16.msra.mxu0 0
      %1119 = vmatprep.subr.bf16.mxu0 0
      %1120 = vmatpush1.bf16.msra.mxu0 0
      %1121 = vmatprep.subr.bf16.mxu0 0
      %1122 = vmatpush1.bf16.msra.mxu0 %v1097
      %1123 = vmatprep.subr.bf16.mxu0 0
      %1124 = vmatpush1.bf16.msra.mxu0 %v1096
      %1125 = vmatprep.subr.bf16.mxu0 0
      %1126 = vmatpush1.bf16.msra.mxu0 %v1095
      %1127 = vmatprep.subr.bf16.mxu0 0
      %1128 = vmatpush1.bf16.msra.mxu0 %v1094
      %1129 = vmatprep.subr.bf16.mxu0 0
      %1130 = vmatpush1.bf16.msra.mxu0 %v1093
      %1131 = vmatprep.subr.bf16.mxu0 0
      %1132 = vmatpush1.bf16.msra.mxu0 %v1092
      %1133 = vmatprep.subr.bf16.mxu0 0
      %1134 = vmatpush2.bf16.msra.mxu0 0
      %1135 = vmatprep.subr.bf16.mxu0 0
      %1136 = vmatpush2.bf16.msra.mxu0 0
      %1137 = vmatprep.subr.bf16.mxu0 0
      %1138 = vmatpush2.bf16.msra.mxu0 0
      %1139 = vmatprep.subr.bf16.mxu0 0
      %1140 = vmatpush2.bf16.msra.mxu0 0
      %1141 = vmatprep.subr.bf16.mxu0 0
      %1142 = vmatpush2.bf16.msra.mxu0 0
      %1143 = vmatprep.subr.bf16.mxu0 0
      %1144 = vmatpush2.bf16.msra.mxu0 0
      %1145 = vmatprep.subr.bf16.mxu0 0
      %1146 = vmatpush2.bf16.msra.mxu0 0
      %1147 = vmatprep.subr.bf16.mxu0 0
      %1148 = vmatpush2.bf16.msra.mxu0 0
      %1149 = vmatprep.mubr.bf16.mxu0 0
      %1150 = vmatmul.mubr.bf16.gmra.mxu0 %v1106
      %v1151 = vpop.f32.mrf.mxu0
      %v1152 = vadd.f32 %v1066, %v1151
      %v1153 = vpop.f32.mrf.mxu0
      %v1154 = vpop.f32.mrf.mxu0
      %v1155 = vadd.f32 %v1066, %v1154
      %v1156 = vpop.f32.mrf.mxu0
      %1157 = vmatprep.mubr.bf16.mxu0 0
      %1158 = vmatmul.mubr.bf16.gmra.mxu0 %v1109
      %v1159 = vpop.f32.mrf.mxu0
      %v1160 = vadd.f32 %v1066, %v1159
      %v1161 = vpop.f32.mrf.mxu0
      %v1162 = vpop.f32.mrf.mxu0
      %v1163 = vadd.f32 %v1066, %v1162
      %v1164 = vpop.f32.mrf.mxu0
      %1165 = vmatprep.mubr.bf16.mxu0 0
      %1166 = vmatmul.mubr.bf16.gmra.mxu0 %v1112
      %v1167 = vpop.f32.mrf.mxu0
      %v1168 = vadd.f32 %v1066, %v1167
      %v1169 = vpop.f32.mrf.mxu0
      %v1170 = vpop.f32.mrf.mxu0
      %v1171 = vadd.f32 %v1066, %v1170
      %v1172 = vpop.f32.mrf.mxu0
      %1173 = vmatprep.mubr.bf16.mxu0 0
      %1174 = vmatmul.mubr.bf16.gmra.mxu0 %v1115
      %v1175 = vpop.f32.mrf.mxu0
      %v1176 = vadd.f32 %v1066, %v1175
      %v1177 = vpop.f32.mrf.mxu0
      %v1178 = vpop.f32.mrf.mxu0
      %v1179 = vadd.f32 %v1066, %v1178
      %v1180 = vpop.f32.mrf.mxu0
      %1181 = vdwg.mxu0
      %vm1182 = vcmp.gt.f32.partialorder %v1152, 0.0
      %vm1183 = vcmp.gt.f32.partialorder %v1155, 0.0
      %vm1184 = vcmp.gt.f32.partialorder %v1160, 0.0
      %vm1185 = vcmp.gt.f32.partialorder %v1163, 0.0
      %vm1186 = vcmp.gt.f32.partialorder %v1168, 0.0
      %vm1187 = vcmp.gt.f32.partialorder %v1171, 0.0
      %vm1188 = vcmp.gt.f32.partialorder %v1176, 0.0
      %vm1189 = vcmp.gt.f32.partialorder %v1179, 0.0
      %v1190 = vmul.f32 %v1152, 0.2
      %v1191 = vmul.f32 %v1155, 0.2
      %v1192 = vmul.f32 %v1160, 0.2
      %v1193 = vmul.f32 %v1163, 0.2
      %v1194 = vmul.f32 %v1168, 0.2
      %v1195 = vmul.f32 %v1171, 0.2
      %v1196 = vmul.f32 %v1176, 0.2
      %v1197 = vmul.f32 %v1179, 0.2
      %v1198 = vsel %vm1182, %v1152, %v1190
      %v1199 = vsel %vm1183, %v1155, %v1191
      %v1200 = vsel %vm1184, %v1160, %v1192
      %v1201 = vsel %vm1185, %v1163, %v1193
      %v1202 = vsel %vm1186, %v1168, %v1194
      %v1203 = vsel %vm1187, %v1171, %v1195
      %v1204 = vsel %vm1188, %v1176, %v1196
      %v1205 = vsel %vm1189, %v1179, %v1197
      %v1206 = vrot.slane %v1198, 7
      %v1207 = vrot.slane %v1199, 7
      %v1208 = vrot.slane %v1200, 7
      %v1209 = vrot.slane %v1201, 7
      %v1210 = vrot.slane %v1202, 7
      %v1211 = vrot.slane %v1203, 7
      %v1212 = vrot.slane %v1204, 7
      %v1213 = vrot.slane %v1205, 7
      %v1214 = vsel %vm635, %v1212, %v1213
      %v1215 = vsel %vm635, %v1211, %v1212
      %v1216 = vsel %vm635, %v1210, %v1211
      %v1217 = vsel %vm635, %v1209, %v1210
      %v1218 = vsel %vm635, %v1208, %v1209
      %v1219 = vsel %vm635, %v1207, %v1208
      %v1220 = vsel %vm635, %v1206, %v1207
      %v1221 = vsel %vm635, %v1213, %v1206
      %v1222 = vsel %vm652, %v1221, 0.0
      %v1223 = vsel %vm653, %v1220, 0.0
      %v1224 = vsel %vm654, %v1219, 0.0
      %v1225 = vsel %vm655, %v1218, 0.0
      %v1226 = vsel %vm656, %v1217, 0.0
      %v1227 = vsel %vm657, %v1216, 0.0
      %v1228 = vsel %vm658, %v1215, 0.0
      %v1229 = vsel %vm659, %v1214, 0.0
      %v1230 = vrot.slane %v1198, 1
      %v1231 = vrot.slane %v1199, 1
      %v1232 = vrot.slane %v1200, 1
      %v1233 = vrot.slane %v1201, 1
      %v1234 = vrot.slane %v1202, 1
      %v1235 = vrot.slane %v1203, 1
      %v1236 = vrot.slane %v1204, 1
      %v1237 = vrot.slane %v1205, 1
      %v1238 = vsel %vm676, %v1236, %v1237
      %v1239 = vsel %vm676, %v1235, %v1236
      %v1240 = vsel %vm676, %v1234, %v1235
      %v1241 = vsel %vm676, %v1233, %v1234
      %v1242 = vsel %vm676, %v1232, %v1233
      %v1243 = vsel %vm676, %v1231, %v1232
      %v1244 = vsel %vm676, %v1230, %v1231
      %v1245 = vsel %vm676, %v1237, %v1230
      %v1246 = vsel %vm693, %v1244, 0.0
      %v1247 = vsel %vm694, %v1243, 0.0
      %v1248 = vsel %vm695, %v1242, 0.0
      %v1249 = vsel %vm696, %v1241, 0.0
      %v1250 = vsel %vm697, %v1240, 0.0
      %v1251 = vsel %vm698, %v1239, 0.0
      %v1252 = vsel %vm699, %v1238, 0.0
      %v1253 = vsel %vm700, %v1245, 0.0
      %1262 = vrot.lane.b32.xlu0 %v1198, 64
      %v1263 = vpop.permute.xlu0 %1262
      %1264 = vrot.lane.b32.xlu0 %v1199, 64
      %v1265 = vpop.permute.xlu0 %1264
      %1266 = vrot.lane.b32.xlu0 %v1200, 64
      %v1267 = vpop.permute.xlu0 %1266
      %1268 = vrot.lane.b32.xlu0 %v1201, 64
      %v1269 = vpop.permute.xlu0 %1268
      %1270 = vrot.lane.b32.xlu0 %v1202, 64
      %v1271 = vpop.permute.xlu0 %1270
      %1272 = vrot.lane.b32.xlu0 %v1203, 64
      %v1273 = vpop.permute.xlu0 %1272
      %1274 = vrot.lane.b32.xlu0 %v1204, 64
      %v1275 = vpop.permute.xlu0 %1274
      %1276 = vrot.lane.b32.xlu0 %v1205, 64
      %v1277 = vpop.permute.xlu0 %1276
      %v1286 = vsel %vm1036, %v1222, %v1263
      %v1287 = vsel %vm1036, %v1223, %v1265
      %v1288 = vsel %vm1036, %v1224, %v1267
      %v1289 = vsel %vm1036, %v1225, %v1269
      %v1290 = vsel %vm1036, %v1226, %v1271
      %v1291 = vsel %vm1036, %v1227, %v1273
      %v1292 = vsel %vm1036, %v1228, %v1275
      %v1293 = vsel %vm1036, %v1229, %v1277
      %v1294 = vpack.c.bf16 %v1287, %v1286
      %v1295 = vpack.c.bf16 %v1247, %v1246
      %v1296 = vpack.c.bf16 %v1289, %v1288
      %v1297 = vpack.c.bf16 %v1249, %v1248
      %v1298 = vpack.c.bf16 %v1291, %v1290
      %v1299 = vpack.c.bf16 %v1251, %v1250
      %v1300 = vpack.c.bf16 %v1293, %v1292
      %v1301 = vpack.c.bf16 %v1253, %v1252
      %v1302 = vld [vmem:[%s5] sm:$0xf]
      %v1303 = vld [vmem:[%s5 + $0x4] sm:$0xf]
      %v1304 = vld [vmem:[%s5 + $0x8] sm:$0xf]
      %v1305 = vld [vmem:[%s5 + $0xc] sm:$0xf]
      %v1306 = vld [vmem:[%s5 + $0x10] sm:$0xf]
      %v1307 = vld [vmem:[%s5 + $0x14] sm:$0xf]
      %v1308 = vld [vmem:[%s5 + $0x18] sm:$0xf]
      %v1309 = vld [vmem:[%s5 + $0x1c] sm:$0xf]
      %v1310 = vld [vmem:[%s5 + $0x20] sm:$0xf]
      %v1311 = vld [vmem:[%s5 + $0x24] sm:$0xf]
      %v1312 = vld [vmem:[%s5 + $0x28] sm:$0xf]
      %v1313 = vld [vmem:[%s5 + $0x2c] sm:$0xf]
      %v1314 = vld [vmem:[%s5 + $0x30] sm:$0xf]
      %v1315 = vld [vmem:[%s5 + $0x34] sm:$0xf]
      %v1316 = vld [vmem:[%s5 + $0x38] sm:$0xf]
      %v1317 = vld [vmem:[%s5 + $0x3c] sm:$0xf]
      %v1318 = vld [vmem:[%s5 + $0x40] sm:$0xf]
      %v1319 = vld [vmem:[%s5 + $0x44] sm:$0xf]
      %v1320 = vld [vmem:[%s5 + $0x48] sm:$0xf]
      %v1321 = vld [vmem:[%s5 + $0x4c] sm:$0xf]
      %v1322 = vld [vmem:[%s5 + $0x50] sm:$0xf]
      %v1323 = vld [vmem:[%s5 + $0x54] sm:$0xf]
      %v1324 = vld [vmem:[%s5 + $0x58] sm:$0xf]
      %v1325 = vld [vmem:[%s5 + $0x5c] sm:$0xf]
      %v1326 = vld [vmem:[%s6] sm:$0x1]
      %v1328 = vlaneseq
      %v1329 = vshrl.u32 %v1328, 7
      %v1330 = vsub.s32 0, %v1329
      %v1331 = vrot.slane %v1326, %v1330
      %v1357 = vunpack.c.l.b16 %v1302
      %v1358 = vunpack.c.l.b16 %v1303
      %v1359 = vunpack.c.l.b16 %v1304
      %v1360 = vunpack.c.l.b16 %v1305
      %v1361 = vunpack.c.l.b16 %v1306
      %v1362 = vunpack.c.l.b16 %v1307
      %v1363 = vunpack.c.l.b16 %v1308
      %v1364 = vunpack.c.l.b16 %v1309
      %v1365 = vunpack.c.l.b16 %v1310
      %v1366 = vunpack.c.l.b16 %v1311
      %v1367 = vunpack.c.l.b16 %v1312
      %v1368 = vunpack.c.l.b16 %v1313
      %v1369 = vunpack.c.l.b16 %v1314
      %v1370 = vunpack.c.l.b16 %v1315
      %v1371 = vunpack.c.l.b16 %v1316
      %v1372 = vunpack.c.l.b16 %v1317
      %v1373 = vunpack.c.l.b16 %v1318
      %v1374 = vunpack.c.l.b16 %v1319
      %v1375 = vunpack.c.l.b16 %v1320
      %v1376 = vunpack.c.l.b16 %v1321
      %v1377 = vunpack.c.l.b16 %v1322
      %v1378 = vunpack.c.l.b16 %v1323
      %v1379 = vunpack.c.l.b16 %v1324
      %v1380 = vunpack.c.l.b16 %v1325
      %v1381 = vpack.c.b16 %v1358, %v1357
      %v1382 = vpack.c.b16 %v1360, %v1359
      %v1383 = vpack.c.b16 %v1362, %v1361
      %v1384 = vpack.c.b16 %v1364, %v1363
      %v1385 = vpack.c.b16 %v1366, %v1365
      %v1386 = vpack.c.b16 %v1368, %v1367
      %v1387 = vpack.c.b16 %v1370, %v1369
      %v1388 = vpack.c.b16 %v1372, %v1371
      %v1389 = vpack.c.b16 %v1374, %v1373
      %v1390 = vpack.c.b16 %v1376, %v1375
      %v1391 = vpack.c.b16 %v1378, %v1377
      %v1392 = vpack.c.b16 %v1380, %v1379
      %v1406 = vsel %vm1036, %v1295, 0
      %v1409 = vsel %vm1036, %v1297, 0
      %v1412 = vsel %vm1036, %v1299, 0
      %v1415 = vsel %vm1036, %v1301, 0
      %1417 = vmatprep.subr.bf16.mxu0 0
      %1418 = vmatpush1.bf16.msra.mxu0 %v1388
      %1419 = vmatprep.subr.bf16.mxu0 0
      %1420 = vmatpush1.bf16.msra.mxu0 %v1387
      %1421 = vmatprep.subr.bf16.mxu0 0
      %1422 = vmatpush1.bf16.msra.mxu0 %v1386
      %1423 = vmatprep.subr.bf16.mxu0 0
      %1424 = vmatpush1.bf16.msra.mxu0 %v1385
      %1425 = vmatprep.subr.bf16.mxu0 0
      %1426 = vmatpush1.bf16.msra.mxu0 %v1384
      %1427 = vmatprep.subr.bf16.mxu0 0
      %1428 = vmatpush1.bf16.msra.mxu0 %v1383
      %1429 = vmatprep.subr.bf16.mxu0 0
      %1430 = vmatpush1.bf16.msra.mxu0 %v1382
      %1431 = vmatprep.subr.bf16.mxu0 0
      %1432 = vmatpush1.bf16.msra.mxu0 %v1381
      %1433 = vmatprep.subr.bf16.mxu0 0
      %1434 = vmatpush2.bf16.msra.mxu0 0
      %1435 = vmatprep.subr.bf16.mxu0 0
      %1436 = vmatpush2.bf16.msra.mxu0 0
      %1437 = vmatprep.subr.bf16.mxu0 0
      %1438 = vmatpush2.bf16.msra.mxu0 0
      %1439 = vmatprep.subr.bf16.mxu0 0
      %1440 = vmatpush2.bf16.msra.mxu0 0
      %1441 = vmatprep.subr.bf16.mxu0 0
      %1442 = vmatpush2.bf16.msra.mxu0 %v1392
      %1443 = vmatprep.subr.bf16.mxu0 0
      %1444 = vmatpush2.bf16.msra.mxu0 %v1391
      %1445 = vmatprep.subr.bf16.mxu0 0
      %1446 = vmatpush2.bf16.msra.mxu0 %v1390
      %1447 = vmatprep.subr.bf16.mxu0 0
      %1448 = vmatpush2.bf16.msra.mxu0 %v1389
      %1449 = vmatprep.mubr.bf16.mxu0 %v1406
      %1450 = vmatmul.mubr.bf16.gmra.mxu0 %v1294
      %v1451 = vpop.f32.mrf.mxu0
      %v1452 = vadd.f32 %v1331, %v1451
      %v1453 = vpop.f32.mrf.mxu0
      %v1454 = vpop.f32.mrf.mxu0
      %v1455 = vadd.f32 %v1331, %v1454
      %v1456 = vpop.f32.mrf.mxu0
      %1457 = vmatprep.mubr.bf16.mxu0 %v1409
      %1458 = vmatmul.mubr.bf16.gmra.mxu0 %v1296
      %v1459 = vpop.f32.mrf.mxu0
      %v1460 = vadd.f32 %v1331, %v1459
      %v1461 = vpop.f32.mrf.mxu0
      %v1462 = vpop.f32.mrf.mxu0
      %v1463 = vadd.f32 %v1331, %v1462
      %v1464 = vpop.f32.mrf.mxu0
      %1465 = vmatprep.mubr.bf16.mxu0 %v1412
      %1466 = vmatmul.mubr.bf16.gmra.mxu0 %v1298
      %v1467 = vpop.f32.mrf.mxu0
      %v1468 = vadd.f32 %v1331, %v1467
      %v1469 = vpop.f32.mrf.mxu0
      %v1470 = vpop.f32.mrf.mxu0
      %v1471 = vadd.f32 %v1331, %v1470
      %v1472 = vpop.f32.mrf.mxu0
      %1473 = vmatprep.mubr.bf16.mxu0 %v1415
      %1474 = vmatmul.mubr.bf16.gmra.mxu0 %v1300
      %v1475 = vpop.f32.mrf.mxu0
      %v1476 = vadd.f32 %v1331, %v1475
      %v1477 = vpop.f32.mrf.mxu0
      %v1478 = vpop.f32.mrf.mxu0
      %v1479 = vadd.f32 %v1331, %v1478
      %v1480 = vpop.f32.mrf.mxu0
      %1481 = vdwg.mxu0
      %vm1482 = vcmp.gt.f32.partialorder %v1452, 0.0
      %vm1483 = vcmp.gt.f32.partialorder %v1455, 0.0
      %vm1484 = vcmp.gt.f32.partialorder %v1460, 0.0
      %vm1485 = vcmp.gt.f32.partialorder %v1463, 0.0
      %vm1486 = vcmp.gt.f32.partialorder %v1468, 0.0
      %vm1487 = vcmp.gt.f32.partialorder %v1471, 0.0
      %vm1488 = vcmp.gt.f32.partialorder %v1476, 0.0
      %vm1489 = vcmp.gt.f32.partialorder %v1479, 0.0
      %v1490 = vmul.f32 %v1452, 0.2
      %v1491 = vmul.f32 %v1455, 0.2
      %v1492 = vmul.f32 %v1460, 0.2
      %v1493 = vmul.f32 %v1463, 0.2
      %v1494 = vmul.f32 %v1468, 0.2
      %v1495 = vmul.f32 %v1471, 0.2
      %v1496 = vmul.f32 %v1476, 0.2
      %v1497 = vmul.f32 %v1479, 0.2
      %v1498 = vsel %vm1482, %v1452, %v1490
      %v1499 = vsel %vm1483, %v1455, %v1491
      %v1500 = vsel %vm1484, %v1460, %v1492
      %v1501 = vsel %vm1485, %v1463, %v1493
      %v1502 = vsel %vm1486, %v1468, %v1494
      %v1503 = vsel %vm1487, %v1471, %v1495
      %v1504 = vsel %vm1488, %v1476, %v1496
      %v1505 = vsel %vm1489, %v1479, %v1497
      %v1506 = vpack.c.bf16 %v1499, %v1498
      %v1507 = vpack.c.bf16 %v1501, %v1500
      %v1508 = vpack.c.bf16 %v1503, %v1502
      %v1509 = vpack.c.bf16 %v1505, %v1504
      %v1510 = vld [vmem:[%s7] sm:$0xff]
      %v1511 = vld [vmem:[%s7 + $0x8] sm:$0xf]
      %v1512 = vld [vmem:[%s7 + $0xc] sm:$0xff]
      %v1513 = vld [vmem:[%s7 + $0x14] sm:$0xf]
      %v1514 = vld [vmem:[%s7 + $0x18] sm:$0xff]
      %v1515 = vld [vmem:[%s7 + $0x20] sm:$0xf]
      %v1516 = vld [vmem:[%s7 + $0x24] sm:$0xff]
      %v1517 = vld [vmem:[%s7 + $0x2c] sm:$0xf]
      %v1518 = vld [vmem:[%s7 + $0x30] sm:$0xff]
      %v1519 = vld [vmem:[%s7 + $0x38] sm:$0xf]
      %v1520 = vld [vmem:[%s7 + $0x3c] sm:$0xff]
      %v1521 = vld [vmem:[%s7 + $0x44] sm:$0xf]
      %v1522 = vld [vmem:[%s7 + $0x48] sm:$0xff]
      %v1523 = vld [vmem:[%s7 + $0x50] sm:$0xf]
      %v1524 = vld [vmem:[%s7 + $0x54] sm:$0xff]
      %v1525 = vld [vmem:[%s7 + $0x5c] sm:$0xf]
      %v1526 = vld [vmem:[%s7 + $0x60] sm:$0xff]
      %v1527 = vld [vmem:[%s7 + $0x68] sm:$0xf]
      %v1528 = vld [vmem:[%s7 + $0x6c] sm:$0xff]
      %v1529 = vld [vmem:[%s7 + $0x74] sm:$0xf]
      %v1530 = vld [vmem:[%s7 + $0x78] sm:$0xff]
      %v1531 = vld [vmem:[%s7 + $0x80] sm:$0xf]
      %v1532 = vld [vmem:[%s7 + $0x84] sm:$0xff]
      %v1533 = vld [vmem:[%s7 + $0x8c] sm:$0xf]
      %v1534 = vld [vmem:[%s7 + $0x90] sm:$0xff]
      %v1535 = vld [vmem:[%s7 + $0x98] sm:$0xf]
      %v1536 = vld [vmem:[%s7 + $0x9c] sm:$0xff]
      %v1537 = vld [vmem:[%s7 + $0xa4] sm:$0xf]
      %v1538 = vld [vmem:[%s7 + $0xa8] sm:$0xff]
      %v1539 = vld [vmem:[%s7 + $0xb0] sm:$0xf]
      %v1540 = vld [vmem:[%s7 + $0xb4] sm:$0xff]
      %v1541 = vld [vmem:[%s7 + $0xbc] sm:$0xf]
      %v1542 = vld [vmem:[%s8] sm:$0x7]
      %v1544 = vlaneseq
      %v1545 = vshrl.u32 %v1544, 7
      %v1546 = vsub.s32 0, %v1545
      %v1547 = vrot.slane %v1542, %v1546
      %v1548 = vlaneseq
      %v1549 = vshrl.u32 %v1548, 7
      %v1550 = vsub.s32 1, %v1549
      %v1551 = vrot.slane %v1542, %v1550
      %v1552 = vlaneseq
      %v1553 = vshrl.u32 %v1552, 7
      %v1554 = vsub.s32 2, %v1553
      %v1555 = vrot.slane %v1542, %v1554
      %v1591 = vunpack.c.l.b16 %v1510
      %v1592 = vunpack.c.h.b16 %v1510
      %v1593 = vunpack.c.l.b16 %v1511
      %v1594 = vunpack.c.l.b16 %v1512
      %v1595 = vunpack.c.h.b16 %v1512
      %v1596 = vunpack.c.l.b16 %v1513
      %v1597 = vunpack.c.l.b16 %v1514
      %v1598 = vunpack.c.h.b16 %v1514
      %v1599 = vunpack.c.l.b16 %v1515
      %v1600 = vunpack.c.l.b16 %v1516
      %v1601 = vunpack.c.h.b16 %v1516
      %v1602 = vunpack.c.l.b16 %v1517
      %v1603 = vunpack.c.l.b16 %v1518
      %v1604 = vunpack.c.h.b16 %v1518
      %v1605 = vunpack.c.l.b16 %v1519
      %v1606 = vunpack.c.l.b16 %v1520
      %v1607 = vunpack.c.h.b16 %v1520
      %v1608 = vunpack.c.l.b16 %v1521
      %v1609 = vunpack.c.l.b16 %v1522
      %v1610 = vunpack.c.h.b16 %v1522
      %v1611 = vunpack.c.l.b16 %v1523
      %v1612 = vunpack.c.l.b16 %v1524
      %v1613 = vunpack.c.h.b16 %v1524
      %v1614 = vunpack.c.l.b16 %v1525
      %v1615 = vunpack.c.l.b16 %v1526
      %v1616 = vunpack.c.h.b16 %v1526
      %v1617 = vunpack.c.l.b16 %v1527
      %v1618 = vunpack.c.l.b16 %v1528
      %v1619 = vunpack.c.h.b16 %v1528
      %v1620 = vunpack.c.l.b16 %v1529
      %v1621 = vunpack.c.l.b16 %v1530
      %v1622 = vunpack.c.h.b16 %v1530
      %v1623 = vunpack.c.l.b16 %v1531
      %v1624 = vunpack.c.l.b16 %v1532
      %v1625 = vunpack.c.h.b16 %v1532
      %v1626 = vunpack.c.l.b16 %v1533
      %v1627 = vunpack.c.l.b16 %v1534
      %v1628 = vunpack.c.h.b16 %v1534
      %v1629 = vunpack.c.l.b16 %v1535
      %v1630 = vunpack.c.l.b16 %v1536
      %v1631 = vunpack.c.h.b16 %v1536
      %v1632 = vunpack.c.l.b16 %v1537
      %v1633 = vunpack.c.l.b16 %v1538
      %v1634 = vunpack.c.h.b16 %v1538
      %v1635 = vunpack.c.l.b16 %v1539
      %v1636 = vunpack.c.l.b16 %v1540
      %v1637 = vunpack.c.h.b16 %v1540
      %v1638 = vunpack.c.l.b16 %v1541
      %v1639 = vpack.c.b16 %v1594, %v1591
      %v1640 = vpack.c.b16 %v1595, %v1592
      %v1641 = vpack.c.b16 %v1596, %v1593
      %v1642 = vpack.c.b16 %v1600, %v1597
      %v1643 = vpack.c.b16 %v1601, %v1598
      %v1644 = vpack.c.b16 %v1602, %v1599
      %v1645 = vpack.c.b16 %v1606, %v1603
      %v1646 = vpack.c.b16 %v1607, %v1604
      %v1647 = vpack.c.b16 %v1608, %v1605
      %v1648 = vpack.c.b16 %v1612, %v1609
      %v1649 = vpack.c.b16 %v1613, %v1610
      %v1650 = vpack.c.b16 %v1614, %v1611
      %v1651 = vpack.c.b16 %v1618, %v1615
      %v1652 = vpack.c.b16 %v1619, %v1616
      %v1653 = vpack.c.b16 %v1620, %v1617
      %v1654 = vpack.c.b16 %v1624, %v1621
      %v1655 = vpack.c.b16 %v1625, %v1622
      %v1656 = vpack.c.b16 %v1626, %v1623
      %v1657 = vpack.c.b16 %v1630, %v1627
      %v1658 = vpack.c.b16 %v1631, %v1628
      %v1659 = vpack.c.b16 %v1632, %v1629
      %v1660 = vpack.c.b16 %v1636, %v1633
      %v1661 = vpack.c.b16 %v1637, %v1634
      %v1662 = vpack.c.b16 %v1638, %v1635
      %1687 = vmatprep.subr.bf16.mxu0 %v1661
      %1688 = vmatpush1.bf16.msra.mxu0 %v1660
      %1689 = vmatprep.subr.bf16.mxu0 %v1658
      %1690 = vmatpush1.bf16.msra.mxu0 %v1657
      %1691 = vmatprep.subr.bf16.mxu0 %v1655
      %1692 = vmatpush1.bf16.msra.mxu0 %v1654
      %1693 = vmatprep.subr.bf16.mxu0 %v1652
      %1694 = vmatpush1.bf16.msra.mxu0 %v1651
      %1695 = vmatprep.subr.bf16.mxu0 %v1649
      %1696 = vmatpush1.bf16.msra.mxu0 %v1648
      %1697 = vmatprep.subr.bf16.mxu0 %v1646
      %1698 = vmatpush1.bf16.msra.mxu0 %v1645
      %1699 = vmatprep.subr.bf16.mxu0 %v1643
      %1700 = vmatpush1.bf16.msra.mxu0 %v1642
      %1701 = vmatprep.subr.bf16.mxu0 %v1640
      %1702 = vmatpush1.bf16.msra.mxu0 %v1639
      %1703 = vmatprep.subr.bf16.mxu0 0
      %1704 = vmatpush2.bf16.msra.mxu0 0
      %1705 = vmatprep.subr.bf16.mxu0 0
      %1706 = vmatpush2.bf16.msra.mxu0 0
      %1707 = vmatprep.subr.bf16.mxu0 0
      %1708 = vmatpush2.bf16.msra.mxu0 0
      %1709 = vmatprep.subr.bf16.mxu0 0
      %1710 = vmatpush2.bf16.msra.mxu0 0
      %1711 = vmatprep.subr.bf16.mxu0 0
      %1712 = vmatpush2.bf16.msra.mxu0 0
      %1713 = vmatprep.subr.bf16.mxu0 0
      %1714 = vmatpush2.bf16.msra.mxu0 0
      %1715 = vmatprep.subr.bf16.mxu0 0
      %1716 = vmatpush2.bf16.msra.mxu0 0
      %1717 = vmatprep.subr.bf16.mxu0 0
      %1718 = vmatpush2.bf16.msra.mxu0 0
      %1719 = vmatprep.mubr.bf16.mxu0 0
      %1720 = vmatmul.mubr.bf16.gmra.mxu0 %v1506
      %v1721 = vpop.f32.mrf.mxu0
      %v1722 = vadd.f32 %v1547, %v1721
      %v1723 = vpop.f32.mrf.mxu0
      %v1724 = vadd.f32 %v1551, %v1723
      %v1725 = vpop.f32.mrf.mxu0
      %v1726 = vadd.f32 %v1547, %v1725
      %v1727 = vpop.f32.mrf.mxu0
      %v1728 = vadd.f32 %v1551, %v1727
      %1729 = vmatprep.mubr.bf16.mxu0 0
      %1730 = vmatmul.mubr.bf16.gmra.mxu0 %v1507
      %v1731 = vpop.f32.mrf.mxu0
      %v1732 = vadd.f32 %v1547, %v1731
      %v1733 = vpop.f32.mrf.mxu0
      %v1734 = vadd.f32 %v1551, %v1733
      %v1735 = vpop.f32.mrf.mxu0
      %v1736 = vadd.f32 %v1547, %v1735
      %v1737 = vpop.f32.mrf.mxu0
      %v1738 = vadd.f32 %v1551, %v1737
      %1739 = vmatprep.mubr.bf16.mxu0 0
      %1740 = vmatmul.mubr.bf16.gmra.mxu0 %v1508
      %v1741 = vpop.f32.mrf.mxu0
      %v1742 = vadd.f32 %v1547, %v1741
      %v1743 = vpop.f32.mrf.mxu0
      %v1744 = vadd.f32 %v1551, %v1743
      %v1745 = vpop.f32.mrf.mxu0
      %v1746 = vadd.f32 %v1547, %v1745
      %v1747 = vpop.f32.mrf.mxu0
      %v1748 = vadd.f32 %v1551, %v1747
      %1749 = vmatprep.mubr.bf16.mxu0 0
      %1750 = vmatmul.mubr.bf16.gmra.mxu0 %v1509
      %v1751 = vpop.f32.mrf.mxu0
      %v1752 = vadd.f32 %v1547, %v1751
      %v1753 = vpop.f32.mrf.mxu0
      %v1754 = vadd.f32 %v1551, %v1753
      %v1755 = vpop.f32.mrf.mxu0
      %v1756 = vadd.f32 %v1547, %v1755
      %v1757 = vpop.f32.mrf.mxu0
      %v1758 = vadd.f32 %v1551, %v1757
      %1759 = vdwg.mxu0
      %1760 = vmatprep.subr.bf16.mxu0 0
      %1761 = vmatpush1.bf16.msra.mxu0 %v1662
      %1762 = vmatprep.subr.bf16.mxu0 0
      %1763 = vmatpush1.bf16.msra.mxu0 %v1659
      %1764 = vmatprep.subr.bf16.mxu0 0
      %1765 = vmatpush1.bf16.msra.mxu0 %v1656
      %1766 = vmatprep.subr.bf16.mxu0 0
      %1767 = vmatpush1.bf16.msra.mxu0 %v1653
      %1768 = vmatprep.subr.bf16.mxu0 0
      %1769 = vmatpush1.bf16.msra.mxu0 %v1650
      %1770 = vmatprep.subr.bf16.mxu0 0
      %1771 = vmatpush1.bf16.msra.mxu0 %v1647
      %1772 = vmatprep.subr.bf16.mxu0 0
      %1773 = vmatpush1.bf16.msra.mxu0 %v1644
      %1774 = vmatprep.subr.bf16.mxu0 0
      %1775 = vmatpush1.bf16.msra.mxu0 %v1641
      %1776 = vmatprep.subr.bf16.mxu0 0
      %1777 = vmatpush2.bf16.msra.mxu0 0
      %1778 = vmatprep.subr.bf16.mxu0 0
      %1779 = vmatpush2.bf16.msra.mxu0 0
      %1780 = vmatprep.subr.bf16.mxu0 0
      %1781 = vmatpush2.bf16.msra.mxu0 0
      %1782 = vmatprep.subr.bf16.mxu0 0
      %1783 = vmatpush2.bf16.msra.mxu0 0
      %1784 = vmatprep.subr.bf16.mxu0 0
      %1785 = vmatpush2.bf16.msra.mxu0 0
      %1786 = vmatprep.subr.bf16.mxu0 0
      %1787 = vmatpush2.bf16.msra.mxu0 0
      %1788 = vmatprep.subr.bf16.mxu0 0
      %1789 = vmatpush2.bf16.msra.mxu0 0
      %1790 = vmatprep.subr.bf16.mxu0 0
      %1791 = vmatpush2.bf16.msra.mxu0 0
      %1792 = vmatprep.mubr.bf16.mxu0 0
      %1793 = vmatmul.mubr.bf16.gmra.mxu0 %v1506
      %v1794 = vpop.f32.mrf.mxu0
      %v1795 = vadd.f32 %v1555, %v1794
      %v1796 = vpop.f32.mrf.mxu0
      %v1797 = vpop.f32.mrf.mxu0
      %v1798 = vadd.f32 %v1555, %v1797
      %v1799 = vpop.f32.mrf.mxu0
      %1800 = vmatprep.mubr.bf16.mxu0 0
      %1801 = vmatmul.mubr.bf16.gmra.mxu0 %v1507
      %v1802 = vpop.f32.mrf.mxu0
      %v1803 = vadd.f32 %v1555, %v1802
      %v1804 = vpop.f32.mrf.mxu0
      %v1805 = vpop.f32.mrf.mxu0
      %v1806 = vadd.f32 %v1555, %v1805
      %v1807 = vpop.f32.mrf.mxu0
      %1808 = vmatprep.mubr.bf16.mxu0 0
      %1809 = vmatmul.mubr.bf16.gmra.mxu0 %v1508
      %v1810 = vpop.f32.mrf.mxu0
      %v1811 = vadd.f32 %v1555, %v1810
      %v1812 = vpop.f32.mrf.mxu0
      %v1813 = vpop.f32.mrf.mxu0
      %v1814 = vadd.f32 %v1555, %v1813
      %v1815 = vpop.f32.mrf.mxu0
      %1816 = vmatprep.mubr.bf16.mxu0 0
      %1817 = vmatmul.mubr.bf16.gmra.mxu0 %v1509
      %v1818 = vpop.f32.mrf.mxu0
      %v1819 = vadd.f32 %v1555, %v1818
      %v1820 = vpop.f32.mrf.mxu0
      %v1821 = vpop.f32.mrf.mxu0
      %v1822 = vadd.f32 %v1555, %v1821
      %v1823 = vpop.f32.mrf.mxu0
      %1824 = vdwg.mxu0
      %v1825 = vpack.c.bf16 %v1722, %v1722
      %v1826 = vpack.c.bf16 %v1726, %v1726
      %v1827 = vpack.c.bf16 %v1732, %v1732
      %v1828 = vpack.c.bf16 %v1736, %v1736
      %v1829 = vpack.c.bf16 %v1742, %v1742
      %v1830 = vpack.c.bf16 %v1746, %v1746
      %v1831 = vpack.c.bf16 %v1752, %v1752
      %v1832 = vpack.c.bf16 %v1756, %v1756
      %v1833 = vpack.c.bf16 %v1724, %v1724
      %v1834 = vpack.c.bf16 %v1728, %v1728
      %v1835 = vpack.c.bf16 %v1734, %v1734
      %v1836 = vpack.c.bf16 %v1738, %v1738
      %v1837 = vpack.c.bf16 %v1744, %v1744
      %v1838 = vpack.c.bf16 %v1748, %v1748
      %v1839 = vpack.c.bf16 %v1754, %v1754
      %v1840 = vpack.c.bf16 %v1758, %v1758
      %1841 = vmatprep.subr.bf16.mxu0 0
      %1842 = vmatpush1.bf16.xpose.msra.mxu0 0
      %1843 = vmatprep.subr.bf16.mxu0 0
      %1844 = vmatpush1.bf16.xpose.msra.mxu0 0
      %1845 = vmatprep.subr.bf16.mxu0 0
      %1846 = vmatpush1.bf16.xpose.msra.mxu0 0
      %1847 = vmatprep.subr.bf16.mxu0 0
      %1848 = vmatpush1.bf16.xpose.msra.mxu0 0
      %1849 = vmatprep.subr.bf16.mxu0 0
      %1850 = vmatpush1.bf16.xpose.msra.mxu0 0
      %1851 = vmatprep.subr.bf16.mxu0 0
      %1852 = vmatpush1.bf16.xpose.msra.mxu0 0
      %1853 = vmatprep.subr.bf16.mxu0 0
      %1854 = vmatpush1.bf16.xpose.msra.mxu0 0
      %1855 = vmatprep.subr.bf16.mxu0 0
      %1856 = vmatpush1.bf16.xpose.msra.mxu0 %v1833
      %1857 = vmatprep.subr.bf16.mxu0 0
      %1858 = vmatpush2.bf16.xpose.msra.mxu0 0
      %1859 = vmatprep.subr.bf16.mxu0 0
      %1860 = vmatpush2.bf16.xpose.msra.mxu0 0
      %1861 = vmatprep.subr.bf16.mxu0 0
      %1862 = vmatpush2.bf16.xpose.msra.mxu0 0
      %1863 = vmatprep.subr.bf16.mxu0 0
      %1864 = vmatpush2.bf16.xpose.msra.mxu0 0
      %1865 = vmatprep.subr.bf16.mxu0 0
      %1866 = vmatpush2.bf16.xpose.msra.mxu0 0
      %1867 = vmatprep.subr.bf16.mxu0 0
      %1868 = vmatpush2.bf16.xpose.msra.mxu0 0
      %1869 = vmatprep.subr.bf16.mxu0 0
      %1870 = vmatpush2.bf16.xpose.msra.mxu0 0
      %1871 = vmatprep.subr.bf16.mxu0 0
      %1872 = vmatpush2.bf16.xpose.msra.mxu0 0
      %1873 = vmatprep.mubr.bf16.mxu0 0
      %1874 = vmatmul.mubr.bf16.gmra.mxu0 %v1825
      %v1875 = vpop.f32.mrf.mxu0
      %v1876 = vadd.f32 0.0, %v1875
      %v1877 = vpop.f32.mrf.mxu0
      %v1878 = vpop.f32.mrf.mxu0
      %v1879 = vpop.f32.mrf.mxu0
      %1880 = vdwg.mxu0
      %1881 = vmatprep.subr.bf16.mxu0 0
      %1882 = vmatpush1.bf16.xpose.msra.mxu0 0
      %1883 = vmatprep.subr.bf16.mxu0 0
      %1884 = vmatpush1.bf16.xpose.msra.mxu0 0
      %1885 = vmatprep.subr.bf16.mxu0 0
      %1886 = vmatpush1.bf16.xpose.msra.mxu0 0
      %1887 = vmatprep.subr.bf16.mxu0 0
      %1888 = vmatpush1.bf16.xpose.msra.mxu0 0
      %1889 = vmatprep.subr.bf16.mxu0 0
      %1890 = vmatpush1.bf16.xpose.msra.mxu0 0
      %1891 = vmatprep.subr.bf16.mxu0 0
      %1892 = vmatpush1.bf16.xpose.msra.mxu0 0
      %1893 = vmatprep.subr.bf16.mxu0 0
      %1894 = vmatpush1.bf16.xpose.msra.mxu0 0
      %1895 = vmatprep.subr.bf16.mxu0 0
      %1896 = vmatpush1.bf16.xpose.msra.mxu0 %v1834
      %1897 = vmatprep.subr.bf16.mxu0 0
      %1898 = vmatpush2.bf16.xpose.msra.mxu0 0
      %1899 = vmatprep.subr.bf16.mxu0 0
      %1900 = vmatpush2.bf16.xpose.msra.mxu0 0
      %1901 = vmatprep.subr.bf16.mxu0 0
      %1902 = vmatpush2.bf16.xpose.msra.mxu0 0
      %1903 = vmatprep.subr.bf16.mxu0 0
      %1904 = vmatpush2.bf16.xpose.msra.mxu0 0
      %1905 = vmatprep.subr.bf16.mxu0 0
      %1906 = vmatpush2.bf16.xpose.msra.mxu0 0
      %1907 = vmatprep.subr.bf16.mxu0 0
      %1908 = vmatpush2.bf16.xpose.msra.mxu0 0
      %1909 = vmatprep.subr.bf16.mxu0 0
      %1910 = vmatpush2.bf16.xpose.msra.mxu0 0
      %1911 = vmatprep.subr.bf16.mxu0 0
      %1912 = vmatpush2.bf16.xpose.msra.mxu0 0
      %1913 = vmatprep.mubr.bf16.mxu0 0
      %1914 = vmatmul.mubr.bf16.gmra.mxu0 %v1826
      %v1915 = vpop.f32.mrf.mxu0
      %v1916 = vadd.f32 0.0, %v1915
      %v1917 = vpop.f32.mrf.mxu0
      %v1918 = vpop.f32.mrf.mxu0
      %v1919 = vpop.f32.mrf.mxu0
      %1920 = vdwg.mxu0
      %1921 = vmatprep.subr.bf16.mxu0 0
      %1922 = vmatpush1.bf16.xpose.msra.mxu0 0
      %1923 = vmatprep.subr.bf16.mxu0 0
      %1924 = vmatpush1.bf16.xpose.msra.mxu0 0
      %1925 = vmatprep.subr.bf16.mxu0 0
      %1926 = vmatpush1.bf16.xpose.msra.mxu0 0
      %1927 = vmatprep.subr.bf16.mxu0 0
      %1928 = vmatpush1.bf16.xpose.msra.mxu0 0
      %1929 = vmatprep.subr.bf16.mxu0 0
      %1930 = vmatpush1.bf16.xpose.msra.mxu0 0
      %1931 = vmatprep.subr.bf16.mxu0 0
      %1932 = vmatpush1.bf16.xpose.msra.mxu0 0
      %1933 = vmatprep.subr.bf16.mxu0 0
      %1934 = vmatpush1.bf16.xpose.msra.mxu0 0
      %1935 = vmatprep.subr.bf16.mxu0 0
      %1936 = vmatpush1.bf16.xpose.msra.mxu0 %v1835
      %1937 = vmatprep.subr.bf16.mxu0 0
      %1938 = vmatpush2.bf16.xpose.msra.mxu0 0
      %1939 = vmatprep.subr.bf16.mxu0 0
      %1940 = vmatpush2.bf16.xpose.msra.mxu0 0
      %1941 = vmatprep.subr.bf16.mxu0 0
      %1942 = vmatpush2.bf16.xpose.msra.mxu0 0
      %1943 = vmatprep.subr.bf16.mxu0 0
      %1944 = vmatpush2.bf16.xpose.msra.mxu0 0
      %1945 = vmatprep.subr.bf16.mxu0 0
      %1946 = vmatpush2.bf16.xpose.msra.mxu0 0
      %1947 = vmatprep.subr.bf16.mxu0 0
      %1948 = vmatpush2.bf16.xpose.msra.mxu0 0
      %1949 = vmatprep.subr.bf16.mxu0 0
      %1950 = vmatpush2.bf16.xpose.msra.mxu0 0
      %1951 = vmatprep.subr.bf16.mxu0 0
      %1952 = vmatpush2.bf16.xpose.msra.mxu0 0
      %1953 = vmatprep.mubr.bf16.mxu0 0
      %1954 = vmatmul.mubr.bf16.gmra.mxu0 %v1827
      %v1955 = vpop.f32.mrf.mxu0
      %v1956 = vadd.f32 0.0, %v1955
      %v1957 = vpop.f32.mrf.mxu0
      %v1958 = vpop.f32.mrf.mxu0
      %v1959 = vpop.f32.mrf.mxu0
      %1960 = vdwg.mxu0
      %1961 = vmatprep.subr.bf16.mxu0 0
      %1962 = vmatpush1.bf16.xpose.msra.mxu0 0
      %1963 = vmatprep.subr.bf16.mxu0 0
      %1964 = vmatpush1.bf16.xpose.msra.mxu0 0
      %1965 = vmatprep.subr.bf16.mxu0 0
      %1966 = vmatpush1.bf16.xpose.msra.mxu0 0
      %1967 = vmatprep.subr.bf16.mxu0 0
      %1968 = vmatpush1.bf16.xpose.msra.mxu0 0
      %1969 = vmatprep.subr.bf16.mxu0 0
      %1970 = vmatpush1.bf16.xpose.msra.mxu0 0
      %1971 = vmatprep.subr.bf16.mxu0 0
      %1972 = vmatpush1.bf16.xpose.msra.mxu0 0
      %1973 = vmatprep.subr.bf16.mxu0 0
      %1974 = vmatpush1.bf16.xpose.msra.mxu0 0
      %1975 = vmatprep.subr.bf16.mxu0 0
      %1976 = vmatpush1.bf16.xpose.msra.mxu0 %v1836
      %1977 = vmatprep.subr.bf16.mxu0 0
      %1978 = vmatpush2.bf16.xpose.msra.mxu0 0
      %1979 = vmatprep.subr.bf16.mxu0 0
      %1980 = vmatpush2.bf16.xpose.msra.mxu0 0
      %1981 = vmatprep.subr.bf16.mxu0 0
      %1982 = vmatpush2.bf16.xpose.msra.mxu0 0
      %1983 = vmatprep.subr.bf16.mxu0 0
      %1984 = vmatpush2.bf16.xpose.msra.mxu0 0
      %1985 = vmatprep.subr.bf16.mxu0 0
      %1986 = vmatpush2.bf16.xpose.msra.mxu0 0
      %1987 = vmatprep.subr.bf16.mxu0 0
      %1988 = vmatpush2.bf16.xpose.msra.mxu0 0
      %1989 = vmatprep.subr.bf16.mxu0 0
      %1990 = vmatpush2.bf16.xpose.msra.mxu0 0
      %1991 = vmatprep.subr.bf16.mxu0 0
      %1992 = vmatpush2.bf16.xpose.msra.mxu0 0
      %1993 = vmatprep.mubr.bf16.mxu0 0
      %1994 = vmatmul.mubr.bf16.gmra.mxu0 %v1828
      %v1995 = vpop.f32.mrf.mxu0
      %v1996 = vadd.f32 0.0, %v1995
      %v1997 = vpop.f32.mrf.mxu0
      %v1998 = vpop.f32.mrf.mxu0
      %v1999 = vpop.f32.mrf.mxu0
      %2000 = vdwg.mxu0
      %2001 = vmatprep.subr.bf16.mxu0 0
      %2002 = vmatpush1.bf16.xpose.msra.mxu0 0
      %2003 = vmatprep.subr.bf16.mxu0 0
      %2004 = vmatpush1.bf16.xpose.msra.mxu0 0
      %2005 = vmatprep.subr.bf16.mxu0 0
      %2006 = vmatpush1.bf16.xpose.msra.mxu0 0
      %2007 = vmatprep.subr.bf16.mxu0 0
      %2008 = vmatpush1.bf16.xpose.msra.mxu0 0
      %2009 = vmatprep.subr.bf16.mxu0 0
      %2010 = vmatpush1.bf16.xpose.msra.mxu0 0
      %2011 = vmatprep.subr.bf16.mxu0 0
      %2012 = vmatpush1.bf16.xpose.msra.mxu0 0
      %2013 = vmatprep.subr.bf16.mxu0 0
      %2014 = vmatpush1.bf16.xpose.msra.mxu0 0
      %2015 = vmatprep.subr.bf16.mxu0 0
      %2016 = vmatpush1.bf16.xpose.msra.mxu0 %v1837
      %2017 = vmatprep.subr.bf16.mxu0 0
      %2018 = vmatpush2.bf16.xpose.msra.mxu0 0
      %2019 = vmatprep.subr.bf16.mxu0 0
      %2020 = vmatpush2.bf16.xpose.msra.mxu0 0
      %2021 = vmatprep.subr.bf16.mxu0 0
      %2022 = vmatpush2.bf16.xpose.msra.mxu0 0
      %2023 = vmatprep.subr.bf16.mxu0 0
      %2024 = vmatpush2.bf16.xpose.msra.mxu0 0
      %2025 = vmatprep.subr.bf16.mxu0 0
      %2026 = vmatpush2.bf16.xpose.msra.mxu0 0
      %2027 = vmatprep.subr.bf16.mxu0 0
      %2028 = vmatpush2.bf16.xpose.msra.mxu0 0
      %2029 = vmatprep.subr.bf16.mxu0 0
      %2030 = vmatpush2.bf16.xpose.msra.mxu0 0
      %2031 = vmatprep.subr.bf16.mxu0 0
      %2032 = vmatpush2.bf16.xpose.msra.mxu0 0
      %2033 = vmatprep.mubr.bf16.mxu0 0
      %2034 = vmatmul.mubr.bf16.gmra.mxu0 %v1829
      %v2035 = vpop.f32.mrf.mxu0
      %v2036 = vadd.f32 0.0, %v2035
      %v2037 = vpop.f32.mrf.mxu0
      %v2038 = vpop.f32.mrf.mxu0
      %v2039 = vpop.f32.mrf.mxu0
      %2040 = vdwg.mxu0
      %2041 = vmatprep.subr.bf16.mxu0 0
      %2042 = vmatpush1.bf16.xpose.msra.mxu0 0
      %2043 = vmatprep.subr.bf16.mxu0 0
      %2044 = vmatpush1.bf16.xpose.msra.mxu0 0
      %2045 = vmatprep.subr.bf16.mxu0 0
      %2046 = vmatpush1.bf16.xpose.msra.mxu0 0
      %2047 = vmatprep.subr.bf16.mxu0 0
      %2048 = vmatpush1.bf16.xpose.msra.mxu0 0
      %2049 = vmatprep.subr.bf16.mxu0 0
      %2050 = vmatpush1.bf16.xpose.msra.mxu0 0
      %2051 = vmatprep.subr.bf16.mxu0 0
      %2052 = vmatpush1.bf16.xpose.msra.mxu0 0
      %2053 = vmatprep.subr.bf16.mxu0 0
      %2054 = vmatpush1.bf16.xpose.msra.mxu0 0
      %2055 = vmatprep.subr.bf16.mxu0 0
      %2056 = vmatpush1.bf16.xpose.msra.mxu0 %v1838
      %2057 = vmatprep.subr.bf16.mxu0 0
      %2058 = vmatpush2.bf16.xpose.msra.mxu0 0
      %2059 = vmatprep.subr.bf16.mxu0 0
      %2060 = vmatpush2.bf16.xpose.msra.mxu0 0
      %2061 = vmatprep.subr.bf16.mxu0 0
      %2062 = vmatpush2.bf16.xpose.msra.mxu0 0
      %2063 = vmatprep.subr.bf16.mxu0 0
      %2064 = vmatpush2.bf16.xpose.msra.mxu0 0
      %2065 = vmatprep.subr.bf16.mxu0 0
      %2066 = vmatpush2.bf16.xpose.msra.mxu0 0
      %2067 = vmatprep.subr.bf16.mxu0 0
      %2068 = vmatpush2.bf16.xpose.msra.mxu0 0
      %2069 = vmatprep.subr.bf16.mxu0 0
      %2070 = vmatpush2.bf16.xpose.msra.mxu0 0
      %2071 = vmatprep.subr.bf16.mxu0 0
      %2072 = vmatpush2.bf16.xpose.msra.mxu0 0
      %2073 = vmatprep.mubr.bf16.mxu0 0
      %2074 = vmatmul.mubr.bf16.gmra.mxu0 %v1830
      %v2075 = vpop.f32.mrf.mxu0
      %v2076 = vadd.f32 0.0, %v2075
      %v2077 = vpop.f32.mrf.mxu0
      %v2078 = vpop.f32.mrf.mxu0
      %v2079 = vpop.f32.mrf.mxu0
      %2080 = vdwg.mxu0
      %2081 = vmatprep.subr.bf16.mxu0 0
      %2082 = vmatpush1.bf16.xpose.msra.mxu0 0
      %2083 = vmatprep.subr.bf16.mxu0 0
      %2084 = vmatpush1.bf16.xpose.msra.mxu0 0
      %2085 = vmatprep.subr.bf16.mxu0 0
      %2086 = vmatpush1.bf16.xpose.msra.mxu0 0
      %2087 = vmatprep.subr.bf16.mxu0 0
      %2088 = vmatpush1.bf16.xpose.msra.mxu0 0
      %2089 = vmatprep.subr.bf16.mxu0 0
      %2090 = vmatpush1.bf16.xpose.msra.mxu0 0
      %2091 = vmatprep.subr.bf16.mxu0 0
      %2092 = vmatpush1.bf16.xpose.msra.mxu0 0
      %2093 = vmatprep.subr.bf16.mxu0 0
      %2094 = vmatpush1.bf16.xpose.msra.mxu0 0
      %2095 = vmatprep.subr.bf16.mxu0 0
      %2096 = vmatpush1.bf16.xpose.msra.mxu0 %v1839
      %2097 = vmatprep.subr.bf16.mxu0 0
      %2098 = vmatpush2.bf16.xpose.msra.mxu0 0
      %2099 = vmatprep.subr.bf16.mxu0 0
      %2100 = vmatpush2.bf16.xpose.msra.mxu0 0
      %2101 = vmatprep.subr.bf16.mxu0 0
      %2102 = vmatpush2.bf16.xpose.msra.mxu0 0
      %2103 = vmatprep.subr.bf16.mxu0 0
      %2104 = vmatpush2.bf16.xpose.msra.mxu0 0
      %2105 = vmatprep.subr.bf16.mxu0 0
      %2106 = vmatpush2.bf16.xpose.msra.mxu0 0
      %2107 = vmatprep.subr.bf16.mxu0 0
      %2108 = vmatpush2.bf16.xpose.msra.mxu0 0
      %2109 = vmatprep.subr.bf16.mxu0 0
      %2110 = vmatpush2.bf16.xpose.msra.mxu0 0
      %2111 = vmatprep.subr.bf16.mxu0 0
      %2112 = vmatpush2.bf16.xpose.msra.mxu0 0
      %2113 = vmatprep.mubr.bf16.mxu0 0
      %2114 = vmatmul.mubr.bf16.gmra.mxu0 %v1831
      %v2115 = vpop.f32.mrf.mxu0
      %v2116 = vadd.f32 0.0, %v2115
      %v2117 = vpop.f32.mrf.mxu0
      %v2118 = vpop.f32.mrf.mxu0
      %v2119 = vpop.f32.mrf.mxu0
      %2120 = vdwg.mxu0
      %2121 = vmatprep.subr.bf16.mxu0 0
      %2122 = vmatpush1.bf16.xpose.msra.mxu0 0
      %2123 = vmatprep.subr.bf16.mxu0 0
      %2124 = vmatpush1.bf16.xpose.msra.mxu0 0
      %2125 = vmatprep.subr.bf16.mxu0 0
      %2126 = vmatpush1.bf16.xpose.msra.mxu0 0
      %2127 = vmatprep.subr.bf16.mxu0 0
      %2128 = vmatpush1.bf16.xpose.msra.mxu0 0
      %2129 = vmatprep.subr.bf16.mxu0 0
      %2130 = vmatpush1.bf16.xpose.msra.mxu0 0
      %2131 = vmatprep.subr.bf16.mxu0 0
      %2132 = vmatpush1.bf16.xpose.msra.mxu0 0
      %2133 = vmatprep.subr.bf16.mxu0 0
      %2134 = vmatpush1.bf16.xpose.msra.mxu0 0
      %2135 = vmatprep.subr.bf16.mxu0 0
      %2136 = vmatpush1.bf16.xpose.msra.mxu0 %v1840
      %2137 = vmatprep.subr.bf16.mxu0 0
      %2138 = vmatpush2.bf16.xpose.msra.mxu0 0
      %2139 = vmatprep.subr.bf16.mxu0 0
      %2140 = vmatpush2.bf16.xpose.msra.mxu0 0
      %2141 = vmatprep.subr.bf16.mxu0 0
      %2142 = vmatpush2.bf16.xpose.msra.mxu0 0
      %2143 = vmatprep.subr.bf16.mxu0 0
      %2144 = vmatpush2.bf16.xpose.msra.mxu0 0
      %2145 = vmatprep.subr.bf16.mxu0 0
      %2146 = vmatpush2.bf16.xpose.msra.mxu0 0
      %2147 = vmatprep.subr.bf16.mxu0 0
      %2148 = vmatpush2.bf16.xpose.msra.mxu0 0
      %2149 = vmatprep.subr.bf16.mxu0 0
      %2150 = vmatpush2.bf16.xpose.msra.mxu0 0
      %2151 = vmatprep.subr.bf16.mxu0 0
      %2152 = vmatpush2.bf16.xpose.msra.mxu0 0
      %2153 = vmatprep.mubr.bf16.mxu0 0
      %2154 = vmatmul.mubr.bf16.gmra.mxu0 %v1832
      %v2155 = vpop.f32.mrf.mxu0
      %v2156 = vadd.f32 0.0, %v2155
      %v2157 = vpop.f32.mrf.mxu0
      %v2158 = vpop.f32.mrf.mxu0
      %v2159 = vpop.f32.mrf.mxu0
      %2160 = vdwg.mxu0
      %v2161 = vsel %vm782, %v1876, -inf
      %2162 = vmax.xlane.f32.xlu0 %v2161
      %v2163 = vpop.xlane.xlu0 %2162
      %v2164 = vsel %vm782, %v1916, -inf
      %2165 = vmax.xlane.f32.xlu0 %v2164
      %v2166 = vpop.xlane.xlu0 %2165
      %v2167 = vsel %vm782, %v1956, -inf
      %2168 = vmax.xlane.f32.xlu0 %v2167
      %v2169 = vpop.xlane.xlu0 %2168
      %v2170 = vsel %vm782, %v1996, -inf
      %2171 = vmax.xlane.f32.xlu0 %v2170
      %v2172 = vpop.xlane.xlu0 %2171
      %v2173 = vsel %vm782, %v2036, -inf
      %2174 = vmax.xlane.f32.xlu0 %v2173
      %v2175 = vpop.xlane.xlu0 %2174
      %v2176 = vsel %vm782, %v2076, -inf
      %2177 = vmax.xlane.f32.xlu0 %v2176
      %v2178 = vpop.xlane.xlu0 %2177
      %v2179 = vsel %vm782, %v2116, -inf
      %2180 = vmax.xlane.f32.xlu0 %v2179
      %v2181 = vpop.xlane.xlu0 %2180
      %v2182 = vsel %vm782, %v2156, -inf
      %2183 = vmax.xlane.f32.xlu0 %v2182
      %v2184 = vpop.xlane.xlu0 %2183
      %v2185 = vsub.f32 %v1876, %v2163
      %v2186 = vsub.f32 %v1916, %v2166
      %v2187 = vsub.f32 %v1956, %v2169
      %v2188 = vsub.f32 %v1996, %v2172
      %v2189 = vsub.f32 %v2036, %v2175
      %v2190 = vsub.f32 %v2076, %v2178
      %v2191 = vsub.f32 %v2116, %v2181
      %v2192 = vsub.f32 %v2156, %v2184
      %v2193 = vmul.f32 %v2185, 1.442695
      %v2194 = vpow.pop %v2193
      %v2195 = vmul.f32 %v2186, 1.442695
      %v2196 = vpow.pop %v2195
      %v2197 = vmul.f32 %v2187, 1.442695
      %v2198 = vpow.pop %v2197
      %v2199 = vmul.f32 %v2188, 1.442695
      %v2200 = vpow.pop %v2199
      %v2201 = vmul.f32 %v2189, 1.442695
      %v2202 = vpow.pop %v2201
      %v2203 = vmul.f32 %v2190, 1.442695
      %v2204 = vpow.pop %v2203
      %v2205 = vmul.f32 %v2191, 1.442695
      %v2206 = vpow.pop %v2205
      %v2207 = vmul.f32 %v2192, 1.442695
      %v2208 = vpow.pop %v2207
      %v2209 = vsel %vm782, %v2194, 0.0
      %2210 = vadd.xlane.f32.xlu0 %v2209
      %v2211 = vpop.xlane.xlu0 %2210
      %v2212 = vsel %vm782, %v2196, 0.0
      %2213 = vadd.xlane.f32.xlu0 %v2212
      %v2214 = vpop.xlane.xlu0 %2213
      %v2215 = vsel %vm782, %v2198, 0.0
      %2216 = vadd.xlane.f32.xlu0 %v2215
      %v2217 = vpop.xlane.xlu0 %2216
      %v2218 = vsel %vm782, %v2200, 0.0
      %2219 = vadd.xlane.f32.xlu0 %v2218
      %v2220 = vpop.xlane.xlu0 %2219
      %v2221 = vsel %vm782, %v2202, 0.0
      %2222 = vadd.xlane.f32.xlu0 %v2221
      %v2223 = vpop.xlane.xlu0 %2222
      %v2224 = vsel %vm782, %v2204, 0.0
      %2225 = vadd.xlane.f32.xlu0 %v2224
      %v2226 = vpop.xlane.xlu0 %2225
      %v2227 = vsel %vm782, %v2206, 0.0
      %2228 = vadd.xlane.f32.xlu0 %v2227
      %v2229 = vpop.xlane.xlu0 %2228
      %v2230 = vsel %vm782, %v2208, 0.0
      %2231 = vadd.xlane.f32.xlu0 %v2230
      %v2232 = vpop.xlane.xlu0 %2231
      %v2233 = vrcp.pop %v2211
      %v2234 = vrcp.pop %v2214
      %v2235 = vrcp.pop %v2217
      %v2236 = vrcp.pop %v2220
      %v2237 = vrcp.pop %v2223
      %v2238 = vrcp.pop %v2226
      %v2239 = vrcp.pop %v2229
      %v2240 = vrcp.pop %v2232
      %v2241 = vmul.f32 %v2194, %v2233
      %v2242 = vmul.f32 %v2196, %v2234
      %v2243 = vmul.f32 %v2198, %v2235
      %v2244 = vmul.f32 %v2200, %v2236
      %v2245 = vmul.f32 %v2202, %v2237
      %v2246 = vmul.f32 %v2204, %v2238
      %v2247 = vmul.f32 %v2206, %v2239
      %v2248 = vmul.f32 %v2208, %v2240
      %v2249 = vsel %vm782, %v2241, 0.0
      %v2250 = vrot.slane %v2249, 4
      %v2251 = vadd.f32 %v2249, %v2250
      %v2252 = vrot.slane %v2251, 2
      %v2253 = vadd.f32 %v2251, %v2252
      %v2254 = vrot.slane %v2253, 1
      %v2255 = vadd.f32 %v2253, %v2254
      %v2256 = vsel %vm782, %v2242, 0.0
      %v2257 = vrot.slane %v2256, 4
      %v2258 = vadd.f32 %v2256, %v2257
      %v2259 = vrot.slane %v2258, 2
      %v2260 = vadd.f32 %v2258, %v2259
      %v2261 = vrot.slane %v2260, 1
      %v2262 = vadd.f32 %v2260, %v2261
      %v2263 = vsel %vm782, %v2243, 0.0
      %v2264 = vrot.slane %v2263, 4
      %v2265 = vadd.f32 %v2263, %v2264
      %v2266 = vrot.slane %v2265, 2
      %v2267 = vadd.f32 %v2265, %v2266
      %v2268 = vrot.slane %v2267, 1
      %v2269 = vadd.f32 %v2267, %v2268
      %v2270 = vsel %vm782, %v2244, 0.0
      %v2271 = vrot.slane %v2270, 4
      %v2272 = vadd.f32 %v2270, %v2271
      %v2273 = vrot.slane %v2272, 2
      %v2274 = vadd.f32 %v2272, %v2273
      %v2275 = vrot.slane %v2274, 1
      %v2276 = vadd.f32 %v2274, %v2275
      %v2277 = vsel %vm782, %v2245, 0.0
      %v2278 = vrot.slane %v2277, 4
      %v2279 = vadd.f32 %v2277, %v2278
      %v2280 = vrot.slane %v2279, 2
      %v2281 = vadd.f32 %v2279, %v2280
      %v2282 = vrot.slane %v2281, 1
      %v2283 = vadd.f32 %v2281, %v2282
      %v2284 = vsel %vm782, %v2246, 0.0
      %v2285 = vrot.slane %v2284, 4
      %v2286 = vadd.f32 %v2284, %v2285
      %v2287 = vrot.slane %v2286, 2
      %v2288 = vadd.f32 %v2286, %v2287
      %v2289 = vrot.slane %v2288, 1
      %v2290 = vadd.f32 %v2288, %v2289
      %v2291 = vsel %vm782, %v2247, 0.0
      %v2292 = vrot.slane %v2291, 4
      %v2293 = vadd.f32 %v2291, %v2292
      %v2294 = vrot.slane %v2293, 2
      %v2295 = vadd.f32 %v2293, %v2294
      %v2296 = vrot.slane %v2295, 1
      %v2297 = vadd.f32 %v2295, %v2296
      %v2298 = vsel %vm782, %v2248, 0.0
      %v2299 = vrot.slane %v2298, 4
      %v2300 = vadd.f32 %v2298, %v2299
      %v2301 = vrot.slane %v2300, 2
      %v2302 = vadd.f32 %v2300, %v2301
      %v2303 = vrot.slane %v2302, 1
      %v2304 = vadd.f32 %v2302, %v2303
      %v2305 = vmul.f32 %v2255, 0.125
      %v2306 = vmul.f32 %v2262, 0.125
      %v2307 = vmul.f32 %v2269, 0.125
      %v2308 = vmul.f32 %v2276, 0.125
      %v2309 = vmul.f32 %v2283, 0.125
      %v2310 = vmul.f32 %v2290, 0.125
      %v2311 = vmul.f32 %v2297, 0.125
      %v2312 = vmul.f32 %v2304, 0.125
      %2314 = vbcast.lane.b32.xlu0 %v2305, 256
      %v2315 = vpop.permute.xlu0 %2314
      %2317 = vbcast.lane.b32.xlu0 %v2306, 256
      %v2318 = vpop.permute.xlu0 %2317
      %2320 = vbcast.lane.b32.xlu0 %v2307, 256
      %v2321 = vpop.permute.xlu0 %2320
      %2323 = vbcast.lane.b32.xlu0 %v2308, 256
      %v2324 = vpop.permute.xlu0 %2323
      %2326 = vbcast.lane.b32.xlu0 %v2309, 256
      %v2327 = vpop.permute.xlu0 %2326
      %2329 = vbcast.lane.b32.xlu0 %v2310, 256
      %v2330 = vpop.permute.xlu0 %2329
      %2332 = vbcast.lane.b32.xlu0 %v2311, 256
      %v2333 = vpop.permute.xlu0 %2332
      %2335 = vbcast.lane.b32.xlu0 %v2312, 256
      %v2336 = vpop.permute.xlu0 %2335
      %v2337 = vmul.f32 %v2315, %v1795
      %v2338 = vmul.f32 %v2318, %v1798
      %v2339 = vmul.f32 %v2321, %v1803
      %v2340 = vmul.f32 %v2324, %v1806
      %v2341 = vmul.f32 %v2327, %v1811
      %v2342 = vmul.f32 %v2330, %v1814
      %v2343 = vmul.f32 %v2333, %v1819
      %v2344 = vmul.f32 %v2336, %v1822
      %v2345 = vrot.slane %v2337, 4
      %v2346 = vadd.f32 %v2337, %v2345
      %v2347 = vrot.slane %v2346, 2
      %v2348 = vadd.f32 %v2346, %v2347
      %v2349 = vrot.slane %v2348, 1
      %v2350 = vadd.f32 %v2348, %v2349
      %v2351 = vrot.slane %v2338, 4
      %v2352 = vadd.f32 %v2338, %v2351
      %v2353 = vrot.slane %v2352, 2
      %v2354 = vadd.f32 %v2352, %v2353
      %v2355 = vrot.slane %v2354, 1
      %v2356 = vadd.f32 %v2354, %v2355
      %v2357 = vrot.slane %v2339, 4
      %v2358 = vadd.f32 %v2339, %v2357
      %v2359 = vrot.slane %v2358, 2
      %v2360 = vadd.f32 %v2358, %v2359
      %v2361 = vrot.slane %v2360, 1
      %v2362 = vadd.f32 %v2360, %v2361
      %v2363 = vrot.slane %v2340, 4
      %v2364 = vadd.f32 %v2340, %v2363
      %v2365 = vrot.slane %v2364, 2
      %v2366 = vadd.f32 %v2364, %v2365
      %v2367 = vrot.slane %v2366, 1
      %v2368 = vadd.f32 %v2366, %v2367
      %v2369 = vrot.slane %v2341, 4
      %v2370 = vadd.f32 %v2341, %v2369
      %v2371 = vrot.slane %v2370, 2
      %v2372 = vadd.f32 %v2370, %v2371
      %v2373 = vrot.slane %v2372, 1
      %v2374 = vadd.f32 %v2372, %v2373
      %v2375 = vrot.slane %v2342, 4
      %v2376 = vadd.f32 %v2342, %v2375
      %v2377 = vrot.slane %v2376, 2
      %v2378 = vadd.f32 %v2376, %v2377
      %v2379 = vrot.slane %v2378, 1
      %v2380 = vadd.f32 %v2378, %v2379
      %v2381 = vrot.slane %v2343, 4
      %v2382 = vadd.f32 %v2343, %v2381
      %v2383 = vrot.slane %v2382, 2
      %v2384 = vadd.f32 %v2382, %v2383
      %v2385 = vrot.slane %v2384, 1
      %v2386 = vadd.f32 %v2384, %v2385
      %v2387 = vrot.slane %v2344, 4
      %v2388 = vadd.f32 %v2344, %v2387
      %v2389 = vrot.slane %v2388, 2
      %v2390 = vadd.f32 %v2388, %v2389
      %v2391 = vrot.slane %v2390, 1
      %v2392 = vadd.f32 %v2390, %v2391
      %v2393 = vpack.c.bf16 %v2350, %v2350
      %v2394 = vpack.c.bf16 %v2356, %v2356
      %v2395 = vpack.c.bf16 %v2362, %v2362
      %v2396 = vpack.c.bf16 %v2368, %v2368
      %v2397 = vpack.c.bf16 %v2374, %v2374
      %v2398 = vpack.c.bf16 %v2380, %v2380
      %v2399 = vpack.c.bf16 %v2386, %v2386
      %v2400 = vpack.c.bf16 %v2392, %v2392
      %v2401 = vld [vmem:[%s9] sm:$0xf]
      %v2402 = vld [vmem:[%s9 + $0x4] sm:$0xf]
      %v2403 = vld [vmem:[%s9 + $0x8] sm:$0xf]
      %v2404 = vld [vmem:[%s9 + $0xc] sm:$0xf]
      %v2405 = vld [vmem:[%s9 + $0x10] sm:$0xf]
      %v2406 = vld [vmem:[%s9 + $0x14] sm:$0xf]
      %v2407 = vld [vmem:[%s9 + $0x18] sm:$0xf]
      %v2408 = vld [vmem:[%s9 + $0x1c] sm:$0xf]
      %v2409 = vld [vmem:[%s9 + $0x20] sm:$0xf]
      %v2410 = vld [vmem:[%s9 + $0x24] sm:$0xf]
      %v2411 = vld [vmem:[%s9 + $0x28] sm:$0xf]
      %v2412 = vld [vmem:[%s9 + $0x2c] sm:$0xf]
      %v2413 = vld [vmem:[%s9 + $0x30] sm:$0xf]
      %v2414 = vld [vmem:[%s9 + $0x34] sm:$0xf]
      %v2415 = vld [vmem:[%s9 + $0x38] sm:$0xf]
      %v2416 = vld [vmem:[%s9 + $0x3c] sm:$0xf]
      %v2417 = vld [vmem:[%s10] sm:$0x1]
      %v2419 = vlaneseq
      %v2420 = vshrl.u32 %v2419, 7
      %v2421 = vsub.s32 0, %v2420
      %v2422 = vrot.slane %v2417, %v2421
      %v2432 = vunpack.c.l.b16 %v2393
      %v2433 = vunpack.c.l.b16 %v2394
      %v2434 = vunpack.c.l.b16 %v2395
      %v2435 = vunpack.c.l.b16 %v2396
      %v2436 = vunpack.c.l.b16 %v2397
      %v2437 = vunpack.c.l.b16 %v2398
      %v2438 = vunpack.c.l.b16 %v2399
      %v2439 = vunpack.c.l.b16 %v2400
      %vm2440 = vcmask 1041409
      %v2441 = vsel %vm2440, %v2433, %v2432
      %vm2442 = vcmask 1042434
      %v2443 = vsel %vm2442, %v2434, %v2441
      %vm2444 = vcmask 1043459
      %v2445 = vsel %vm2444, %v2435, %v2443
      %vm2446 = vcmask 1044484
      %v2447 = vsel %vm2446, %v2436, %v2445
      %vm2448 = vcmask 1045509
      %v2449 = vsel %vm2448, %v2437, %v2447
      %vm2450 = vcmask 1046534
      %v2451 = vsel %vm2450, %v2438, %v2449
      %vm2452 = vcmask 1047559
      %v2453 = vsel %vm2452, %v2439, %v2451
      %v2454 = vpack.c.b16 %v2453, %v2453
      %v2472 = vunpack.c.l.b16 %v2401
      %v2473 = vunpack.c.l.b16 %v2402
      %v2474 = vunpack.c.l.b16 %v2403
      %v2475 = vunpack.c.l.b16 %v2404
      %v2476 = vunpack.c.l.b16 %v2405
      %v2477 = vunpack.c.l.b16 %v2406
      %v2478 = vunpack.c.l.b16 %v2407
      %v2479 = vunpack.c.l.b16 %v2408
      %v2480 = vunpack.c.l.b16 %v2409
      %v2481 = vunpack.c.l.b16 %v2410
      %v2482 = vunpack.c.l.b16 %v2411
      %v2483 = vunpack.c.l.b16 %v2412
      %v2484 = vunpack.c.l.b16 %v2413
      %v2485 = vunpack.c.l.b16 %v2414
      %v2486 = vunpack.c.l.b16 %v2415
      %v2487 = vunpack.c.l.b16 %v2416
      %v2488 = vpack.c.b16 %v2473, %v2472
      %v2489 = vpack.c.b16 %v2475, %v2474
      %v2490 = vpack.c.b16 %v2477, %v2476
      %v2491 = vpack.c.b16 %v2479, %v2478
      %v2492 = vpack.c.b16 %v2481, %v2480
      %v2493 = vpack.c.b16 %v2483, %v2482
      %v2494 = vpack.c.b16 %v2485, %v2484
      %v2495 = vpack.c.b16 %v2487, %v2486
      %2504 = vmatprep.subr.bf16.mxu0 0
      %2505 = vmatpush1.bf16.msra.mxu0 %v2495
      %2506 = vmatprep.subr.bf16.mxu0 0
      %2507 = vmatpush1.bf16.msra.mxu0 %v2494
      %2508 = vmatprep.subr.bf16.mxu0 0
      %2509 = vmatpush1.bf16.msra.mxu0 %v2493
      %2510 = vmatprep.subr.bf16.mxu0 0
      %2511 = vmatpush1.bf16.msra.mxu0 %v2492
      %2512 = vmatprep.subr.bf16.mxu0 0
      %2513 = vmatpush1.bf16.msra.mxu0 %v2491
      %2514 = vmatprep.subr.bf16.mxu0 0
      %2515 = vmatpush1.bf16.msra.mxu0 %v2490
      %2516 = vmatprep.subr.bf16.mxu0 0
      %2517 = vmatpush1.bf16.msra.mxu0 %v2489
      %2518 = vmatprep.subr.bf16.mxu0 0
      %2519 = vmatpush1.bf16.msra.mxu0 %v2488
      %2520 = vmatprep.subr.bf16.mxu0 0
      %2521 = vmatpush2.bf16.msra.mxu0 0
      %2522 = vmatprep.subr.bf16.mxu0 0
      %2523 = vmatpush2.bf16.msra.mxu0 0
      %2524 = vmatprep.subr.bf16.mxu0 0
      %2525 = vmatpush2.bf16.msra.mxu0 0
      %2526 = vmatprep.subr.bf16.mxu0 0
      %2527 = vmatpush2.bf16.msra.mxu0 0
      %2528 = vmatprep.subr.bf16.mxu0 0
      %2529 = vmatpush2.bf16.msra.mxu0 0
      %2530 = vmatprep.subr.bf16.mxu0 0
      %2531 = vmatpush2.bf16.msra.mxu0 0
      %2532 = vmatprep.subr.bf16.mxu0 0
      %2533 = vmatpush2.bf16.msra.mxu0 0
      %2534 = vmatprep.subr.bf16.mxu0 0
      %2535 = vmatpush2.bf16.msra.mxu0 0
      %2536 = vmatprep.mubr.bf16.mxu0 0
      %2537 = vmatmul.mubr.bf16.gmra.mxu0 %v2454
      %v2538 = vpop.f32.mrf.mxu0
      %v2539 = vadd.f32 %v2422, %v2538
      %v2540 = vpop.f32.mrf.mxu0
      %v2541 = vpop.f32.mrf.mxu0
      %v2542 = vpop.f32.mrf.mxu0
      %2543 = vdwg.mxu0
      %vm2544 = vcmp.gt.f32.partialorder %v2539, 0.0
      %v2545 = vmul.f32 %v2539, 0.2
      %v2546 = vsel %vm2544, %v2539, %v2545
      %v2547 = vpack.c.bf16 %v2546, %v2546
      %v2548 = vld [vmem:[%s11] sm:$0xf]
      %v2549 = vld [vmem:[%s11 + $0x4] sm:$0xf]
      %v2550 = vld [vmem:[%s11 + $0x8] sm:$0xf]
      %v2551 = vld [vmem:[%s11 + $0xc] sm:$0xf]
      %v2552 = vld [vmem:[%s11 + $0x10] sm:$0xf]
      %v2553 = vld [vmem:[%s11 + $0x14] sm:$0xf]
      %v2554 = vld [vmem:[%s11 + $0x18] sm:$0xf]
      %v2555 = vld [vmem:[%s11 + $0x1c] sm:$0xf]
      %v2556 = vld [vmem:[%s12] sm:$0x1]
      %v2558 = vlaneseq
      %v2559 = vshrl.u32 %v2558, 7
      %v2560 = vsub.s32 0, %v2559
      %v2561 = vrot.slane %v2556, %v2560
      %v2571 = vunpack.c.l.b16 %v2548
      %v2572 = vunpack.c.l.b16 %v2549
      %v2573 = vunpack.c.l.b16 %v2550
      %v2574 = vunpack.c.l.b16 %v2551
      %v2575 = vunpack.c.l.b16 %v2552
      %v2576 = vunpack.c.l.b16 %v2553
      %v2577 = vunpack.c.l.b16 %v2554
      %v2578 = vunpack.c.l.b16 %v2555
      %v2579 = vpack.c.b16 %v2572, %v2571
      %v2580 = vpack.c.b16 %v2574, %v2573
      %v2581 = vpack.c.b16 %v2576, %v2575
      %v2582 = vpack.c.b16 %v2578, %v2577
      %v2588 = vsel %vm1036, %v2547, 0
      %2590 = vmatprep.subr.bf16.mxu0 0
      %2591 = vmatpush1.bf16.msra.mxu0 0
      %2592 = vmatprep.subr.bf16.mxu0 0
      %2593 = vmatpush1.bf16.msra.mxu0 0
      %2594 = vmatprep.subr.bf16.mxu0 0
      %2595 = vmatpush1.bf16.msra.mxu0 0
      %2596 = vmatprep.subr.bf16.mxu0 0
      %2597 = vmatpush1.bf16.msra.mxu0 0
      %2598 = vmatprep.subr.bf16.mxu0 0
      %2599 = vmatpush1.bf16.msra.mxu0 %v2582
      %2600 = vmatprep.subr.bf16.mxu0 0
      %2601 = vmatpush1.bf16.msra.mxu0 %v2581
      %2602 = vmatprep.subr.bf16.mxu0 0
      %2603 = vmatpush1.bf16.msra.mxu0 %v2580
      %2604 = vmatprep.subr.bf16.mxu0 0
      %2605 = vmatpush1.bf16.msra.mxu0 %v2579
      %2606 = vmatprep.subr.bf16.mxu0 0
      %2607 = vmatpush2.bf16.msra.mxu0 0
      %2608 = vmatprep.subr.bf16.mxu0 0
      %2609 = vmatpush2.bf16.msra.mxu0 0
      %2610 = vmatprep.subr.bf16.mxu0 0
      %2611 = vmatpush2.bf16.msra.mxu0 0
      %2612 = vmatprep.subr.bf16.mxu0 0
      %2613 = vmatpush2.bf16.msra.mxu0 0
      %2614 = vmatprep.subr.bf16.mxu0 0
      %2615 = vmatpush2.bf16.msra.mxu0 0
      %2616 = vmatprep.subr.bf16.mxu0 0
      %2617 = vmatpush2.bf16.msra.mxu0 0
      %2618 = vmatprep.subr.bf16.mxu0 0
      %2619 = vmatpush2.bf16.msra.mxu0 0
      %2620 = vmatprep.subr.bf16.mxu0 0
      %2621 = vmatpush2.bf16.msra.mxu0 0
      %2622 = vmatprep.mubr.bf16.mxu0 0
      %2623 = vmatmul.mubr.bf16.gmra.mxu0 %v2588
      %v2624 = vpop.f32.mrf.mxu0
      %v2625 = vadd.f32 %v2561, %v2624
      %v2626 = vpop.f32.mrf.mxu0
      %v2627 = vpop.f32.mrf.mxu0
      %v2628 = vpop.f32.mrf.mxu0
      %2629 = vdwg.mxu0
      %vm2630 = vcmp.gt.f32.partialorder %v2625, 0.0
      %v2631 = vmul.f32 %v2625, 0.2
      %v2632 = vsel %vm2630, %v2625, %v2631
      %v2633 = vpack.c.bf16 %v2632, %v2632
      %v2634 = vld [vmem:[%s13] sm:$0xf]
      %v2635 = vld [vmem:[%s13 + $0x4] sm:$0xf]
      %v2636 = vld [vmem:[%s13 + $0x8] sm:$0xf]
      %v2637 = vld [vmem:[%s13 + $0xc] sm:$0xf]
      %v2638 = vld [vmem:[#allocation2] sm:$0x1]
      %v2640 = vlaneseq
      %v2641 = vshrl.u32 %v2640, 7
      %v2642 = vsub.s32 0, %v2641
      %v2643 = vrot.slane %v2638, %v2642
      %v2649 = vunpack.c.l.b16 %v2634
      %v2650 = vunpack.c.l.b16 %v2635
      %v2651 = vunpack.c.l.b16 %v2636
      %v2652 = vunpack.c.l.b16 %v2637
      %v2653 = vpack.c.b16 %v2650, %v2649
      %v2654 = vpack.c.b16 %v2652, %v2651
      %v2658 = vsel %vm1027, %v2633, 0
      %2660 = vmatprep.subr.bf16.mxu0 0
      %2661 = vmatpush1.bf16.msra.mxu0 0
      %2662 = vmatprep.subr.bf16.mxu0 0
      %2663 = vmatpush1.bf16.msra.mxu0 0
      %2664 = vmatprep.subr.bf16.mxu0 0
      %2665 = vmatpush1.bf16.msra.mxu0 0
      %2666 = vmatprep.subr.bf16.mxu0 0
      %2667 = vmatpush1.bf16.msra.mxu0 0
      %2668 = vmatprep.subr.bf16.mxu0 0
      %2669 = vmatpush1.bf16.msra.mxu0 0
      %2670 = vmatprep.subr.bf16.mxu0 0
      %2671 = vmatpush1.bf16.msra.mxu0 0
      %2672 = vmatprep.subr.bf16.mxu0 0
      %2673 = vmatpush1.bf16.msra.mxu0 %v2654
      %2674 = vmatprep.subr.bf16.mxu0 0
      %2675 = vmatpush1.bf16.msra.mxu0 %v2653
      %2676 = vmatprep.subr.bf16.mxu0 0
      %2677 = vmatpush2.bf16.msra.mxu0 0
      %2678 = vmatprep.subr.bf16.mxu0 0
      %2679 = vmatpush2.bf16.msra.mxu0 0
      %2680 = vmatprep.subr.bf16.mxu0 0
      %2681 = vmatpush2.bf16.msra.mxu0 0
      %2682 = vmatprep.subr.bf16.mxu0 0
      %2683 = vmatpush2.bf16.msra.mxu0 0
      %2684 = vmatprep.subr.bf16.mxu0 0
      %2685 = vmatpush2.bf16.msra.mxu0 0
      %2686 = vmatprep.subr.bf16.mxu0 0
      %2687 = vmatpush2.bf16.msra.mxu0 0
      %2688 = vmatprep.subr.bf16.mxu0 0
      %2689 = vmatpush2.bf16.msra.mxu0 0
      %2690 = vmatprep.subr.bf16.mxu0 0
      %2691 = vmatpush2.bf16.msra.mxu0 0
      %2692 = vmatprep.mubr.bf16.mxu0 0
      %2693 = vmatmul.mubr.bf16.gmra.mxu0 %v2658
      %v2694 = vpop.f32.mrf.mxu0
      %v2695 = vadd.f32 %v2643, %v2694
      %v2696 = vpop.f32.mrf.mxu0
      %v2697 = vpop.f32.mrf.mxu0
      %v2698 = vpop.f32.mrf.mxu0
      %2699 = vdwg.mxu0
      %v2700 = vxor.u32 %v2695, 2147483648
      %v2701 = vmul.f32 %v2700, 1.442695
      %v2702 = vpow.pop %v2701
      %v2703 = vadd.f32 %v2702, 1.0
      %v2704 = vrcp.pop %v2703
      %v2705 = vmul.f32 1.0, %v2704
      %vm2706 = vcmask 7168
      %2707 = vst.msk [vmem:[%s496] sm:$0xff] %vm2706, %v2705
      %p2708 = scmp.lt.s32.totalorder %s28, 1
      %s2709 = scalar_select %p2708, %s28, 1
      %s2710 = smul.addr %s2709, 8
      %s2711 = scalar_lea.vmem %s15, %s2710
      // Predicated region
      $region81: #{discriminator_forward.1} parent=79 // pred_check
        %p2712 = pneg %p366
      $region82: #{discriminator_forward.1} parent=79 // pred_check_branch
        %2714 = sbr.rel (%p2712) target = $region84
      $region83: #{discriminator_forward.1} parent=79 // pred_region
        _
      $region84: #{discriminator_forward.1} parent=79 // pred_fallthru
        _
    $region80: #{discriminator_forward.1} parent=5 // pred_fallthru
      _
    %p2715 = scmp.le.s32.totalorder 2, %s23
    // Predicated region
    $region85: #{discriminator_forward.1} parent=5 // pred_check
      %p2716 = pneg %p2715
    $region86: #{discriminator_forward.1} parent=5 // pred_check_branch
      %2718 = sbr.rel (%p2716) target = $region88
    $region87: #{discriminator_forward.1} parent=5 // pred_region
      %s2719 = ssub.s32 %s23, 2
      // Predicated region
      $region89: #{discriminator_forward.1} parent=87 // pred_check
        %p2720 = pneg %p372
      $region90: #{discriminator_forward.1} parent=87 // pred_check_branch
        %2722 = sbr.rel (%p2720) target = $region92
      $region91: #{discriminator_forward.1} parent=87 // pred_region
        %p2723 = scmp.lt.s32.totalorder %s29, 1
        %s2724 = scalar_select %p2723, %s29, 1
        %s2725 = smul.addr %s2724, 8
        %s2726 = scalar_lea.vmem %s15, %s2725
      $region92: #{discriminator_forward.1} parent=87 // pred_fallthru
        _
    $region88: #{discriminator_forward.1} parent=5 // pred_fallthru
      _
  $region6: #{discriminator_forward.1} parent=0 // loop_footer
    %s27 = sadd.s32 1, %s23
  $region7: #{discriminator_forward.1} parent=0 // loop_footer_branch
    %22 = sbr.rel target = $region3
  $region8: #{discriminator_forward.1} parent=0 // loop_exit
    _

</llo_original>
